<compile_context>
chip_gen: v6e
topology: v6e:2x2x1
jax: 0.10.0
libtpu: 0.0.40
codegen_flags: <defaults>
</compile_context>

<pallas_src>
import functools
import math

import jax
import jax.numpy as jnp
from jax.experimental import pallas as pl
from jax.experimental.pallas import tpu as pltpu

LN_EPS = 1e-5  # torch.nn.LayerNorm default


# ----------------------------- in-kernel helpers -----------------------------

def _erf(x):
    # Abramowitz & Stegun 7.1.26 rational approximation (~1.5e-7 abs err),
    # matches torch's exact-erf nn.GELU() to bf16-tolerance accuracy.
    a1, a2, a3, a4, a5 = 0.254829592, -0.284496736, 1.421413741, -1.453152027, 1.061405429
    p = 0.3275911
    ax = jnp.abs(x)
    t = 1.0 / (1.0 + p * ax)
    poly = ((((a5 * t + a4) * t + a3) * t + a2) * t + a1) * t
    y = 1.0 - poly * jnp.exp(-ax * ax)
    return jnp.where(x >= 0, y, -y)


def _gelu_exact(x):
    return 0.5 * x * (1.0 + _erf(x * (1.0 / math.sqrt(2.0))))


def _layer_norm(h, gamma, beta):
    mu = jnp.mean(h, axis=-1, keepdims=True)
    var = jnp.mean((h - mu) * (h - mu), axis=-1, keepdims=True)
    return (h - mu) * jax.lax.rsqrt(var + LN_EPS) * gamma + beta


# --------------------------------- kernel ------------------------------------

def encode_block_kernel(n_head, L,
                        x_ref,
                        wqkv_ref, bqkv_ref,
                        wp_ref, bp_ref,
                        w1_ref, b1_ref, w2_ref, b2_ref,
                        g1_ref, be1_ref, g2_ref, be2_ref,
                        o_ref):
    R, D = x_ref.shape                 # R = Bt * L rows in this grid step
    Bt = R // L
    hd = D // n_head
    n_chunks = 3 * n_head              # [K heads | Q heads | V heads]
    HB = n_head * Bt
    scale = 1.0 / math.sqrt(hd)

    # Row-wise work runs directly on the 2-D (R, D) slab (no in-kernel flatten).
    x = x_ref[...].astype(jnp.float32)            # f32 residual copy
    xb = x.astype(jnp.bfloat16)

    # ---- fused QKV projection: one (R,D) x (D,3D) MXU sequence, f32 accum ----
    qkv = jnp.dot(xb, wqkv_ref[...],
                  preferred_element_type=jnp.float32) + bqkv_ref[...]   # (R, 3D)

    # ---- head split: single concat into a (3*H*Bt, L, hd) batch -------------
    # Column order of wqkv is [k_h0..k_h{H-1} | q_h0.. | v_h0..], so chunk c
    # lands at batch rows [c*Bt, (c+1)*Bt).
    qkv3 = qkv.reshape(Bt, L, n_chunks * hd)
    heads = jnp.concatenate(
        [qkv3[:, :, c * hd:(c + 1) * hd] for c in range(n_chunks)], axis=0
    ).astype(jnp.bfloat16)                                             # (3*HB, L, hd)
    kh = heads[:HB]                    # leading-axis slices: cheap
    qh = heads[HB:2 * HB]
    vh = heads[2 * HB:]

    # ---- attention: Q.K^T without an explicit transpose ----------------------
    att = jnp.einsum('bqd,bkd->bqk', qh, kh,
                     preferred_element_type=jnp.float32) * scale       # (HB, Lq, Lk)

    # Reference applies F.softmax(att, dim=2) on (B, nh, Lq, Lk): normalization
    # is over the *query* axis -> axis 1 here.  Deliberate; do not "fix".
    att = att - jnp.max(att, axis=1, keepdims=True)
    p = jnp.exp(att)
    p = p * pl.reciprocal(jnp.sum(p, axis=1, keepdims=True), approx=True)

    yh = jnp.einsum('bqk,bkd->bqd', p.astype(jnp.bfloat16), vh,
                    preferred_element_type=jnp.float32)                # (HB, Lq, hd)

    # ---- merge heads back to (R, D), head-major feature layout ---------------
    y = jnp.concatenate([yh[h * Bt:(h + 1) * Bt] for h in range(n_head)],
                        axis=-1).reshape(R, D)

    # ---- output projection ----------------------------------------------------
    y = jnp.dot(y.astype(jnp.bfloat16), wp_ref[...],
                preferred_element_type=jnp.float32) + bp_ref[...]

    # ---- residual + LayerNorm 1 ----------------------------------------------
    h1 = _layer_norm(x + y, g1_ref[...], be1_ref[...])

    # ---- MLP: Linear -> GELU(exact) -> Linear ---------------------------------
    m = jnp.dot(h1.astype(jnp.bfloat16), w1_ref[...],
                preferred_element_type=jnp.float32) + b1_ref[...]
    m = _gelu_exact(m)
    m = jnp.dot(m.astype(jnp.bfloat16), w2_ref[...],
                preferred_element_type=jnp.float32) + b2_ref[...]

    # ---- residual + LayerNorm 2, direct 2-D store -----------------------------
    o_ref[...] = _layer_norm(h1 + m, g2_ref[...], be2_ref[...]).astype(o_ref.dtype)


# --------------------------------- wrapper -----------------------------------

def encode_block(x, params, n_head, batch_blocks=1):
    """Weights are stored (in, out): y = x @ W + b.  Anyone loading real
    PyTorch nn.Linear weights (stored (out, in)) must transpose them first.

    batch_blocks: keep 1 unless each per-core slab has >= ~128 rows
    (B*L/batch_blocks); at tiny B*L, sharding across TensorCores is
    neutral-to-negative."""
    B, L, D = x.shape
    assert B % batch_blocks == 0
    R = B * L
    Rt = R // batch_blocks

    # Fused QKV weight/bias built wrapper-side: columns = [K | Q | V], each D wide
    # (and head-major within each).  Weights bf16 (MXU-native, half the VMEM);
    # biases / LN affine stay f32.
    wqkv = jnp.concatenate([params["wk"], params["wq"], params["wv"]],
                           axis=1).astype(jnp.bfloat16)                 # (D, 3D)
    bqkv = jnp.concatenate([params["bk"], params["bq"], params["bv"]],
                           axis=1)                                      # (1, 3D) f32

    args = [
        wqkv, bqkv,
        params["wp"].astype(jnp.bfloat16), params["bp"],
        params["w1"].astype(jnp.bfloat16), params["b1"],
        params["w2"].astype(jnp.bfloat16), params["b2"],
        params["g1"], params["be1"], params["g2"], params["be2"],
    ]

    # Grid-invariant parameter blocks (full array, constant index_map).  With
    # grid=(1,) their double-buffering is moot; if D is scaled up, single-buffer
    # them (pipeline_mode=pl.Buffered(1)) and set vmem_limit_bytes explicitly.
    param_specs = [pl.BlockSpec(p.shape, lambda b: (0, 0)) for p in args]

    # Wrapper-side flatten: contiguous row-major (B, L, D) -> (B*L, D) is free.
    x2 = x.reshape(R, D)

    out = pl.pallas_call(
        functools.partial(encode_block_kernel, n_head, L),
        out_shape=jax.ShapeDtypeStruct((R, D), x.dtype),
        grid=(batch_blocks,),
        in_specs=[pl.BlockSpec((Rt, D), lambda b: (b, 0))] + param_specs,
        out_specs=pl.BlockSpec((Rt, D), lambda b: (b, 0)),
        compiler_params=pltpu.CompilerParams(dimension_semantics=("parallel",)),
    )(x2, *args)

    return out.reshape(B, L, D)


# ------------------------- deterministic parameter init ----------------------

def make_params(key, n_embd):
    """Mirrors the PyTorch init: orthogonal_ weights (gain 0.01, or relu gain
    sqrt(2) for the first MLP linear), zero biases, default LayerNorm affine."""
    D = n_embd
    ks = jax.random.split(key, 6)
    ortho = jax.nn.initializers.orthogonal()
    gain_small = 0.01
    gain_relu = math.sqrt(2.0)          # nn.init.calculate_gain('relu')

    def lin(k, gain):
        w = gain * ortho(k, (D, D), jnp.float32)   # stored (in, out): y = x @ W + b
        b = jnp.zeros((1, D), jnp.float32)
        return w, b

    wk, bk = lin(ks[0], gain_small)
    wq, bq = lin(ks[1], gain_small)
    wv, bv = lin(ks[2], gain_small)
    wp, bp = lin(ks[3], gain_small)
    w1, b1 = lin(ks[4], gain_relu)
    w2, b2 = lin(ks[5], gain_small)

    return {
        "wk": wk, "bk": bk, "wq": wq, "bq": bq, "wv": wv, "bv": bv,
        "wp": wp, "bp": bp, "w1": w1, "b1": b1, "w2": w2, "b2": b2,
        "g1": jnp.ones((1, D), jnp.float32), "be1": jnp.zeros((1, D), jnp.float32),
        "g2": jnp.ones((1, D), jnp.float32), "be2": jnp.zeros((1, D), jnp.float32),
    }


# ------------------------------ pure-JAX reference ---------------------------

def encode_block_reference(x, p, n_head):
    B, L, D = x.shape
    hd = D // n_head

    k = x @ p["wk"] + p["bk"]
    q = x @ p["wq"] + p["bq"]
    v = x @ p["wv"] + p["bv"]

    def split(t):
        return t.reshape(B, L, n_head, hd).transpose(0, 2, 1, 3)

    kh, qh, vh = split(k), split(q), split(v)
    att = (qh @ kh.transpose(0, 1, 3, 2)) * (1.0 / math.sqrt(hd))
    att = jax.nn.softmax(att, axis=2)            # dim=2 as in the reference
    y = (att @ vh).transpose(0, 2, 1, 3).reshape(B, L, D)
    y = y @ p["wp"] + p["bp"]

    def ln(h, g, b):
        mu = h.mean(-1, keepdims=True)
        var = ((h - mu) ** 2).mean(-1, keepdims=True)
        return (h - mu) / jnp.sqrt(var + LN_EPS) * g + b

    h1 = ln(x + y, p["g1"], p["be1"])
    m = jax.nn.gelu(h1 @ p["w1"] + p["b1"], approximate=False) @ p["w2"] + p["b2"]
    return ln(h1 + m, p["g2"], p["be2"])


# ----------------------------------- main ------------------------------------

if __name__ == "__main__":
    B, n_agent, n_embd, n_head = 2, 8, 32, 4
    L = n_agent                              # mask buffer unused (masked=False)

    key = jax.random.PRNGKey(0)
    k_x, k_p = jax.random.split(key)
    x = jax.random.normal(k_x, (B, L, n_embd), jnp.float32)
    params = make_params(k_p, n_embd)

    out = encode_block(x, params, n_head)
    out = jax.block_until_ready(out)

    ref = encode_block_reference(x, params, n_head)
    assert out.shape == (B, L, n_embd)
    # bf16 MXU operands (weights + activations) + approx reciprocal set the
    # tolerance; agreement with the f32 reference is typically ~1e-4.
    assert bool(jnp.allclose(out, ref, atol=2e-3, rtol=2e-3)), "mismatch vs reference"

    print("KERNEL_OK")
</pallas_src>

<mosaic_0001>
module attributes {stable_mosaic.version = 11 : i64} {
  func.func @encode_block_kernel(%arg0: i32, %arg1: memref<16x32xf32, #tpu.memory_space<vmem>>, %arg2: memref<32x96xbf16, #tpu.memory_space<vmem>>, %arg3: memref<1x96xf32, #tpu.memory_space<vmem>>, %arg4: memref<32x32xbf16, #tpu.memory_space<vmem>>, %arg5: memref<1x32xf32, #tpu.memory_space<vmem>>, %arg6: memref<32x32xbf16, #tpu.memory_space<vmem>>, %arg7: memref<1x32xf32, #tpu.memory_space<vmem>>, %arg8: memref<32x32xbf16, #tpu.memory_space<vmem>>, %arg9: memref<1x32xf32, #tpu.memory_space<vmem>>, %arg10: memref<1x32xf32, #tpu.memory_space<vmem>>, %arg11: memref<1x32xf32, #tpu.memory_space<vmem>>, %arg12: memref<1x32xf32, #tpu.memory_space<vmem>>, %arg13: memref<1x32xf32, #tpu.memory_space<vmem>>, %arg14: memref<16x32xf32, #tpu.memory_space<vmem>>) attributes {dimension_semantics = [#tpu.dimension_semantics<parallel>], iteration_bounds = array<i64: 1>, scalar_prefetch = 0 : i64, scratch_operands = 0 : i64, tpu.core_type = #tpu.core_type<tc>, window_params = [{transform_indices = @transform_0, window_bounds = array<i64: 16, 32>}, {pipeline_mode = #tpu.pipeline_mode<synchronous>, transform_indices = @transform_1, window_bounds = array<i64: 32, 96>}, {pipeline_mode = #tpu.pipeline_mode<synchronous>, transform_indices = @transform_2, window_bounds = array<i64: 1, 96>}, {pipeline_mode = #tpu.pipeline_mode<synchronous>, transform_indices = @transform_3, window_bounds = array<i64: 32, 32>}, {pipeline_mode = #tpu.pipeline_mode<synchronous>, transform_indices = @transform_4, window_bounds = array<i64: 1, 32>}, {pipeline_mode = #tpu.pipeline_mode<synchronous>, transform_indices = @transform_5, window_bounds = array<i64: 32, 32>}, {pipeline_mode = #tpu.pipeline_mode<synchronous>, transform_indices = @transform_6, window_bounds = array<i64: 1, 32>}, {pipeline_mode = #tpu.pipeline_mode<synchronous>, transform_indices = @transform_7, window_bounds = array<i64: 32, 32>}, {pipeline_mode = #tpu.pipeline_mode<synchronous>, transform_indices = @transform_8, window_bounds = array<i64: 1, 32>}, {pipeline_mode = #tpu.pipeline_mode<synchronous>, transform_indices = @transform_9, window_bounds = array<i64: 1, 32>}, {pipeline_mode = #tpu.pipeline_mode<synchronous>, transform_indices = @transform_10, window_bounds = array<i64: 1, 32>}, {pipeline_mode = #tpu.pipeline_mode<synchronous>, transform_indices = @transform_11, window_bounds = array<i64: 1, 32>}, {pipeline_mode = #tpu.pipeline_mode<synchronous>, transform_indices = @transform_12, window_bounds = array<i64: 1, 32>}, {transform_indices = @transform_13, window_bounds = array<i64: 16, 32>}]} {
    %c0 = arith.constant 0 : index
    %c0_0 = arith.constant 0 : index
    %0 = vector.load %arg1[%c0, %c0_0] : memref<16x32xf32, #tpu.memory_space<vmem>>, vector<16x32xf32>
    %1 = arith.truncf %0 : vector<16x32xf32> to vector<16x32xbf16>
    %c0_1 = arith.constant 0 : index
    %c0_2 = arith.constant 0 : index
    %2 = vector.load %arg2[%c0_1, %c0_2] : memref<32x96xbf16, #tpu.memory_space<vmem>>, vector<32x96xbf16>
    %cst = arith.constant dense<0.000000e+00> : vector<16x96xf32>
    %3 = tpu.matmul %1, %2, %cst {dimension_numbers = #tpu.dot_dimension_numbers<[1], [0], [0], [1], [0, 0, 1, 1], [], []>} : vector<16x32xbf16>, vector<32x96xbf16>, vector<16x96xf32> -> vector<16x96xf32>
    %c0_3 = arith.constant 0 : index
    %c0_4 = arith.constant 0 : index
    %4 = vector.load %arg3[%c0_3, %c0_4] : memref<1x96xf32, #tpu.memory_space<vmem>>, vector<1x96xf32>
    %5 = vector.broadcast %4 : vector<1x96xf32> to vector<16x96xf32>
    %6 = arith.addf %3, %5 : vector<16x96xf32>
    %7 = vector.shape_cast %6 : vector<16x96xf32> to vector<2x8x96xf32>
    %8 = vector.extract_strided_slice %7 {offsets = [0, 0, 0], sizes = [2, 8, 8], strides = [1, 1, 1]} : vector<2x8x96xf32> to vector<2x8x8xf32>
    %9 = vector.extract_strided_slice %7 {offsets = [0, 0, 8], sizes = [2, 8, 8], strides = [1, 1, 1]} : vector<2x8x96xf32> to vector<2x8x8xf32>
    %10 = vector.extract_strided_slice %7 {offsets = [0, 0, 16], sizes = [2, 8, 8], strides = [1, 1, 1]} : vector<2x8x96xf32> to vector<2x8x8xf32>
    %11 = vector.extract_strided_slice %7 {offsets = [0, 0, 24], sizes = [2, 8, 8], strides = [1, 1, 1]} : vector<2x8x96xf32> to vector<2x8x8xf32>
    %12 = vector.extract_strided_slice %7 {offsets = [0, 0, 32], sizes = [2, 8, 8], strides = [1, 1, 1]} : vector<2x8x96xf32> to vector<2x8x8xf32>
    %13 = vector.extract_strided_slice %7 {offsets = [0, 0, 40], sizes = [2, 8, 8], strides = [1, 1, 1]} : vector<2x8x96xf32> to vector<2x8x8xf32>
    %14 = vector.extract_strided_slice %7 {offsets = [0, 0, 48], sizes = [2, 8, 8], strides = [1, 1, 1]} : vector<2x8x96xf32> to vector<2x8x8xf32>
    %15 = vector.extract_strided_slice %7 {offsets = [0, 0, 56], sizes = [2, 8, 8], strides = [1, 1, 1]} : vector<2x8x96xf32> to vector<2x8x8xf32>
    %16 = vector.extract_strided_slice %7 {offsets = [0, 0, 64], sizes = [2, 8, 8], strides = [1, 1, 1]} : vector<2x8x96xf32> to vector<2x8x8xf32>
    %17 = vector.extract_strided_slice %7 {offsets = [0, 0, 72], sizes = [2, 8, 8], strides = [1, 1, 1]} : vector<2x8x96xf32> to vector<2x8x8xf32>
    %18 = vector.extract_strided_slice %7 {offsets = [0, 0, 80], sizes = [2, 8, 8], strides = [1, 1, 1]} : vector<2x8x96xf32> to vector<2x8x8xf32>
    %19 = vector.extract_strided_slice %7 {offsets = [0, 0, 88], sizes = [2, 8, 8], strides = [1, 1, 1]} : vector<2x8x96xf32> to vector<2x8x8xf32>
    %20 = tpu.concatenate %8, %9, %10, %11, %12, %13, %14, %15, %16, %17, %18, %19 in 0 : vector<2x8x8xf32>, vector<2x8x8xf32>, vector<2x8x8xf32>, vector<2x8x8xf32>, vector<2x8x8xf32>, vector<2x8x8xf32>, vector<2x8x8xf32>, vector<2x8x8xf32>, vector<2x8x8xf32>, vector<2x8x8xf32>, vector<2x8x8xf32>, vector<2x8x8xf32> -> vector<24x8x8xf32>
    %21 = arith.truncf %20 : vector<24x8x8xf32> to vector<24x8x8xbf16>
    %22 = vector.extract_strided_slice %21 {offsets = [0, 0, 0], sizes = [8, 8, 8], strides = [1, 1, 1]} : vector<24x8x8xbf16> to vector<8x8x8xbf16>
    %23 = vector.extract_strided_slice %21 {offsets = [8, 0, 0], sizes = [8, 8, 8], strides = [1, 1, 1]} : vector<24x8x8xbf16> to vector<8x8x8xbf16>
    %24 = vector.extract_strided_slice %21 {offsets = [16, 0, 0], sizes = [8, 8, 8], strides = [1, 1, 1]} : vector<24x8x8xbf16> to vector<8x8x8xbf16>
    "tpu.trace_start"() <{level = 10 : i32, message = "bqd,bkd->bqk"}> : () -> ()
    %cst_5 = arith.constant dense<0.000000e+00> : vector<8x8x8xf32>
    %25 = tpu.matmul %23, %22, %cst_5 {dimension_numbers = #tpu.dot_dimension_numbers<[2], [2], [1], [1], [0, 0, 0, 1, 1, 1], [0], [0]>} : vector<8x8x8xbf16>, vector<8x8x8xbf16>, vector<8x8x8xf32> -> vector<8x8x8xf32>
    "tpu.trace_stop"() : () -> ()
    %cst_6 = arith.constant 0.353553385 : f32
    %26 = vector.broadcast %cst_6 : f32 to vector<8x8x8xf32>
    %27 = arith.mulf %25, %26 : vector<8x8x8xf32>
    %cst_7 = arith.constant dense<0xFF800000> : vector<8x8xf32>
    %28 = vector.multi_reduction <maximumf>, %27, %cst_7 [1] : vector<8x8x8xf32> to vector<8x8xf32>
    %29 = vector.shape_cast %28 : vector<8x8xf32> to vector<8x1x8xf32>
    %30 = vector.broadcast %29 : vector<8x1x8xf32> to vector<8x8x8xf32>
    %31 = arith.subf %27, %30 : vector<8x8x8xf32>
    %32 = math.exp %31 : vector<8x8x8xf32>
    %cst_8 = arith.constant dense<0.000000e+00> : vector<8x8xf32>
    %33 = vector.multi_reduction <add>, %32, %cst_8 [1] : vector<8x8x8xf32> to vector<8x8xf32>
    %34 = vector.shape_cast %33 : vector<8x8xf32> to vector<8x1x8xf32>
    %35 = tpu.reciprocal %34 {approx = true} : vector<8x1x8xf32> -> vector<8x1x8xf32>
    %36 = vector.broadcast %35 : vector<8x1x8xf32> to vector<8x8x8xf32>
    %37 = arith.mulf %32, %36 : vector<8x8x8xf32>
    %38 = arith.truncf %37 : vector<8x8x8xf32> to vector<8x8x8xbf16>
    "tpu.trace_start"() <{level = 10 : i32, message = "bqk,bkd->bqd"}> : () -> ()
    %cst_9 = arith.constant dense<0.000000e+00> : vector<8x8x8xf32>
    %39 = tpu.matmul %38, %24, %cst_9 {dimension_numbers = #tpu.dot_dimension_numbers<[2], [1], [1], [2], [0, 0, 0, 1, 1, 2], [0], [0]>} : vector<8x8x8xbf16>, vector<8x8x8xbf16>, vector<8x8x8xf32> -> vector<8x8x8xf32>
    "tpu.trace_stop"() : () -> ()
    %40 = vector.extract_strided_slice %39 {offsets = [0, 0, 0], sizes = [2, 8, 8], strides = [1, 1, 1]} : vector<8x8x8xf32> to vector<2x8x8xf32>
    %41 = vector.extract_strided_slice %39 {offsets = [2, 0, 0], sizes = [2, 8, 8], strides = [1, 1, 1]} : vector<8x8x8xf32> to vector<2x8x8xf32>
    %42 = vector.extract_strided_slice %39 {offsets = [4, 0, 0], sizes = [2, 8, 8], strides = [1, 1, 1]} : vector<8x8x8xf32> to vector<2x8x8xf32>
    %43 = vector.extract_strided_slice %39 {offsets = [6, 0, 0], sizes = [2, 8, 8], strides = [1, 1, 1]} : vector<8x8x8xf32> to vector<2x8x8xf32>
    %44 = tpu.concatenate %40, %41, %42, %43 in 2 : vector<2x8x8xf32>, vector<2x8x8xf32>, vector<2x8x8xf32>, vector<2x8x8xf32> -> vector<2x8x32xf32>
    %45 = vector.shape_cast %44 : vector<2x8x32xf32> to vector<16x32xf32>
    %46 = arith.truncf %45 : vector<16x32xf32> to vector<16x32xbf16>
    %c0_10 = arith.constant 0 : index
    %c0_11 = arith.constant 0 : index
    %47 = vector.load %arg4[%c0_10, %c0_11] : memref<32x32xbf16, #tpu.memory_space<vmem>>, vector<32x32xbf16>
    %cst_12 = arith.constant dense<0.000000e+00> : vector<16x32xf32>
    %48 = tpu.matmul %46, %47, %cst_12 {dimension_numbers = #tpu.dot_dimension_numbers<[1], [0], [0], [1], [0, 0, 1, 1], [], []>} : vector<16x32xbf16>, vector<32x32xbf16>, vector<16x32xf32> -> vector<16x32xf32>
    %c0_13 = arith.constant 0 : index
    %c0_14 = arith.constant 0 : index
    %49 = vector.load %arg5[%c0_13, %c0_14] : memref<1x32xf32, #tpu.memory_space<vmem>>, vector<1x32xf32>
    %50 = vector.broadcast %49 : vector<1x32xf32> to vector<16x32xf32>
    %51 = arith.addf %48, %50 : vector<16x32xf32>
    %52 = arith.addf %0, %51 : vector<16x32xf32>
    %c0_15 = arith.constant 0 : index
    %c0_16 = arith.constant 0 : index
    %53 = vector.load %arg10[%c0_15, %c0_16] : memref<1x32xf32, #tpu.memory_space<vmem>>, vector<1x32xf32>
    %c0_17 = arith.constant 0 : index
    %c0_18 = arith.constant 0 : index
    %54 = vector.load %arg11[%c0_17, %c0_18] : memref<1x32xf32, #tpu.memory_space<vmem>>, vector<1x32xf32>
    %cst_19 = arith.constant dense<0.000000e+00> : vector<16xf32>
    %55 = vector.multi_reduction <add>, %52, %cst_19 [1] : vector<16x32xf32> to vector<16xf32>
    %56 = vector.shape_cast %55 : vector<16xf32> to vector<16x1xf32>
    %cst_20 = arith.constant 3.200000e+01 : f32
    %57 = vector.broadcast %cst_20 : f32 to vector<16x1xf32>
    %58 = arith.divf %56, %57 : vector<16x1xf32>
    %59 = vector.broadcast %58 : vector<16x1xf32> to vector<16x32xf32>
    %60 = arith.subf %52, %59 : vector<16x32xf32>
    %61 = vector.broadcast %58 : vector<16x1xf32> to vector<16x32xf32>
    %62 = arith.subf %52, %61 : vector<16x32xf32>
    %63 = arith.mulf %60, %62 : vector<16x32xf32>
    %cst_21 = arith.constant dense<0.000000e+00> : vector<16xf32>
    %64 = vector.multi_reduction <add>, %63, %cst_21 [1] : vector<16x32xf32> to vector<16xf32>
    %65 = vector.shape_cast %64 : vector<16xf32> to vector<16x1xf32>
    %cst_22 = arith.constant 3.200000e+01 : f32
    %66 = vector.broadcast %cst_22 : f32 to vector<16x1xf32>
    %67 = arith.divf %65, %66 : vector<16x1xf32>
    %68 = vector.broadcast %58 : vector<16x1xf32> to vector<16x32xf32>
    %69 = arith.subf %52, %68 : vector<16x32xf32>
    %cst_23 = arith.constant 9.99999974E-6 : f32
    %70 = vector.broadcast %cst_23 : f32 to vector<16x1xf32>
    %71 = arith.addf %67, %70 : vector<16x1xf32>
    %72 = math.rsqrt %71 : vector<16x1xf32>
    %73 = vector.broadcast %72 : vector<16x1xf32> to vector<16x32xf32>
    %74 = arith.mulf %69, %73 : vector<16x32xf32>
    %75 = vector.broadcast %53 : vector<1x32xf32> to vector<16x32xf32>
    %76 = arith.mulf %74, %75 : vector<16x32xf32>
    %77 = vector.broadcast %54 : vector<1x32xf32> to vector<16x32xf32>
    %78 = arith.addf %76, %77 : vector<16x32xf32>
    %79 = arith.truncf %78 : vector<16x32xf32> to vector<16x32xbf16>
    %c0_24 = arith.constant 0 : index
    %c0_25 = arith.constant 0 : index
    %80 = vector.load %arg6[%c0_24, %c0_25] : memref<32x32xbf16, #tpu.memory_space<vmem>>, vector<32x32xbf16>
    %cst_26 = arith.constant dense<0.000000e+00> : vector<16x32xf32>
    %81 = tpu.matmul %79, %80, %cst_26 {dimension_numbers = #tpu.dot_dimension_numbers<[1], [0], [0], [1], [0, 0, 1, 1], [], []>} : vector<16x32xbf16>, vector<32x32xbf16>, vector<16x32xf32> -> vector<16x32xf32>
    %c0_27 = arith.constant 0 : index
    %c0_28 = arith.constant 0 : index
    %82 = vector.load %arg7[%c0_27, %c0_28] : memref<1x32xf32, #tpu.memory_space<vmem>>, vector<1x32xf32>
    %83 = vector.broadcast %82 : vector<1x32xf32> to vector<16x32xf32>
    %84 = arith.addf %81, %83 : vector<16x32xf32>
    %cst_29 = arith.constant 5.000000e-01 : f32
    %85 = vector.broadcast %cst_29 : f32 to vector<16x32xf32>
    %86 = arith.mulf %85, %84 : vector<16x32xf32>
    %cst_30 = arith.constant 0.707106769 : f32
    %87 = vector.broadcast %cst_30 : f32 to vector<16x32xf32>
    %88 = arith.mulf %84, %87 : vector<16x32xf32>
    %89 = math.absf %88 : vector<16x32xf32>
    %cst_31 = arith.constant 0.327591091 : f32
    %90 = vector.broadcast %cst_31 : f32 to vector<16x32xf32>
    %91 = arith.mulf %90, %89 : vector<16x32xf32>
    %cst_32 = arith.constant 1.000000e+00 : f32
    %92 = vector.broadcast %cst_32 : f32 to vector<16x32xf32>
    %93 = arith.addf %92, %91 : vector<16x32xf32>
    %cst_33 = arith.constant 1.000000e+00 : f32
    %94 = vector.broadcast %cst_33 : f32 to vector<16x32xf32>
    %95 = arith.divf %94, %93 : vector<16x32xf32>
    %cst_34 = arith.constant 1.06140542 : f32
    %96 = vector.broadcast %cst_34 : f32 to vector<16x32xf32>
    %97 = arith.mulf %96, %95 : vector<16x32xf32>
    %cst_35 = arith.constant -1.45315206 : f32
    %98 = vector.broadcast %cst_35 : f32 to vector<16x32xf32>
    %99 = arith.addf %97, %98 : vector<16x32xf32>
    %100 = arith.mulf %99, %95 : vector<16x32xf32>
    %cst_36 = arith.constant 1.42141378 : f32
    %101 = vector.broadcast %cst_36 : f32 to vector<16x32xf32>
    %102 = arith.addf %100, %101 : vector<16x32xf32>
    %103 = arith.mulf %102, %95 : vector<16x32xf32>
    %cst_37 = arith.constant -0.284496725 : f32
    %104 = vector.broadcast %cst_37 : f32 to vector<16x32xf32>
    %105 = arith.addf %103, %104 : vector<16x32xf32>
    %106 = arith.mulf %105, %95 : vector<16x32xf32>
    %cst_38 = arith.constant 0.254829586 : f32
    %107 = vector.broadcast %cst_38 : f32 to vector<16x32xf32>
    %108 = arith.addf %106, %107 : vector<16x32xf32>
    %109 = arith.mulf %108, %95 : vector<16x32xf32>
    %cst_39 = arith.constant 0.000000e+00 : f32
    %110 = vector.broadcast %cst_39 : f32 to vector<16x32xf32>
    %111 = arith.subf %110, %89 : vector<16x32xf32>
    %112 = arith.mulf %111, %89 : vector<16x32xf32>
    %113 = math.exp %112 : vector<16x32xf32>
    %114 = arith.mulf %109, %113 : vector<16x32xf32>
    %cst_40 = arith.constant 1.000000e+00 : f32
    %115 = vector.broadcast %cst_40 : f32 to vector<16x32xf32>
    %116 = arith.subf %115, %114 : vector<16x32xf32>
    %cst_41 = arith.constant 0.000000e+00 : f32
    %117 = vector.broadcast %cst_41 : f32 to vector<16x32xf32>
    %118 = arith.cmpf oge, %88, %117 : vector<16x32xf32>
    %cst_42 = arith.constant 0.000000e+00 : f32
    %119 = vector.broadcast %cst_42 : f32 to vector<16x32xf32>
    %120 = arith.subf %119, %116 : vector<16x32xf32>
    %121 = arith.select %118, %116, %120 : vector<16x32xi1>, vector<16x32xf32>
    %cst_43 = arith.constant 1.000000e+00 : f32
    %122 = vector.broadcast %cst_43 : f32 to vector<16x32xf32>
    %123 = arith.addf %122, %121 : vector<16x32xf32>
    %124 = arith.mulf %86, %123 : vector<16x32xf32>
    %125 = arith.truncf %124 : vector<16x32xf32> to vector<16x32xbf16>
    %c0_44 = arith.constant 0 : index
    %c0_45 = arith.constant 0 : index
    %126 = vector.load %arg8[%c0_44, %c0_45] : memref<32x32xbf16, #tpu.memory_space<vmem>>, vector<32x32xbf16>
    %cst_46 = arith.constant dense<0.000000e+00> : vector<16x32xf32>
    %127 = tpu.matmul %125, %126, %cst_46 {dimension_numbers = #tpu.dot_dimension_numbers<[1], [0], [0], [1], [0, 0, 1, 1], [], []>} : vector<16x32xbf16>, vector<32x32xbf16>, vector<16x32xf32> -> vector<16x32xf32>
    %c0_47 = arith.constant 0 : index
    %c0_48 = arith.constant 0 : index
    %128 = vector.load %arg9[%c0_47, %c0_48] : memref<1x32xf32, #tpu.memory_space<vmem>>, vector<1x32xf32>
    %129 = vector.broadcast %128 : vector<1x32xf32> to vector<16x32xf32>
    %130 = arith.addf %127, %129 : vector<16x32xf32>
    %131 = arith.addf %78, %130 : vector<16x32xf32>
    %c0_49 = arith.constant 0 : index
    %c0_50 = arith.constant 0 : index
    %132 = vector.load %arg12[%c0_49, %c0_50] : memref<1x32xf32, #tpu.memory_space<vmem>>, vector<1x32xf32>
    %c0_51 = arith.constant 0 : index
    %c0_52 = arith.constant 0 : index
    %133 = vector.load %arg13[%c0_51, %c0_52] : memref<1x32xf32, #tpu.memory_space<vmem>>, vector<1x32xf32>
    %cst_53 = arith.constant dense<0.000000e+00> : vector<16xf32>
    %134 = vector.multi_reduction <add>, %131, %cst_53 [1] : vector<16x32xf32> to vector<16xf32>
    %135 = vector.shape_cast %134 : vector<16xf32> to vector<16x1xf32>
    %cst_54 = arith.constant 3.200000e+01 : f32
    %136 = vector.broadcast %cst_54 : f32 to vector<16x1xf32>
    %137 = arith.divf %135, %136 : vector<16x1xf32>
    %138 = vector.broadcast %137 : vector<16x1xf32> to vector<16x32xf32>
    %139 = arith.subf %131, %138 : vector<16x32xf32>
    %140 = vector.broadcast %137 : vector<16x1xf32> to vector<16x32xf32>
    %141 = arith.subf %131, %140 : vector<16x32xf32>
    %142 = arith.mulf %139, %141 : vector<16x32xf32>
    %cst_55 = arith.constant dense<0.000000e+00> : vector<16xf32>
    %143 = vector.multi_reduction <add>, %142, %cst_55 [1] : vector<16x32xf32> to vector<16xf32>
    %144 = vector.shape_cast %143 : vector<16xf32> to vector<16x1xf32>
    %cst_56 = arith.constant 3.200000e+01 : f32
    %145 = vector.broadcast %cst_56 : f32 to vector<16x1xf32>
    %146 = arith.divf %144, %145 : vector<16x1xf32>
    %147 = vector.broadcast %137 : vector<16x1xf32> to vector<16x32xf32>
    %148 = arith.subf %131, %147 : vector<16x32xf32>
    %cst_57 = arith.constant 9.99999974E-6 : f32
    %149 = vector.broadcast %cst_57 : f32 to vector<16x1xf32>
    %150 = arith.addf %146, %149 : vector<16x1xf32>
    %151 = math.rsqrt %150 : vector<16x1xf32>
    %152 = vector.broadcast %151 : vector<16x1xf32> to vector<16x32xf32>
    %153 = arith.mulf %148, %152 : vector<16x32xf32>
    %154 = vector.broadcast %132 : vector<1x32xf32> to vector<16x32xf32>
    %155 = arith.mulf %153, %154 : vector<16x32xf32>
    %156 = vector.broadcast %133 : vector<1x32xf32> to vector<16x32xf32>
    %157 = arith.addf %155, %156 : vector<16x32xf32>
    %c0_58 = arith.constant 0 : index
    %c0_59 = arith.constant 0 : index
    %158 = vector.load %arg14[%c0_58, %c0_59] : memref<16x32xf32, #tpu.memory_space<vmem>>, vector<16x32xf32>
    tpu.vector_store %arg14[%c0_58, %c0_59], %157 {strides = array<i32>} : memref<16x32xf32, #tpu.memory_space<vmem>>, vector<16x32xf32>,
    return
  }
  func.func @transform_0(%arg0: i32) -> (i32, i32) {
    %c0_i32 = arith.constant 0 : i32
    %c0_i32_0 = arith.constant 0 : i32
    return %arg0, %c0_i32 : i32, i32
  }
  func.func @transform_1(%arg0: i32) -> (i32, i32) {
    %c0_i32 = arith.constant 0 : i32
    %c0_i32_0 = arith.constant 0 : i32
    %c0_i32_1 = arith.constant 0 : i32
    return %c0_i32, %c0_i32_0 : i32, i32
  }
  func.func @transform_2(%arg0: i32) -> (i32, i32) {
    %c0_i32 = arith.constant 0 : i32
    %c0_i32_0 = arith.constant 0 : i32
    %c0_i32_1 = arith.constant 0 : i32
    return %c0_i32, %c0_i32_0 : i32, i32
  }
  func.func @transform_3(%arg0: i32) -> (i32, i32) {
    %c0_i32 = arith.constant 0 : i32
    %c0_i32_0 = arith.constant 0 : i32
    %c0_i32_1 = arith.constant 0 : i32
    return %c0_i32, %c0_i32_0 : i32, i32
  }
  func.func @transform_4(%arg0: i32) -> (i32, i32) {
    %c0_i32 = arith.constant 0 : i32
    %c0_i32_0 = arith.constant 0 : i32
    %c0_i32_1 = arith.constant 0 : i32
    return %c0_i32, %c0_i32_0 : i32, i32
  }
  func.func @transform_5(%arg0: i32) -> (i32, i32) {
    %c0_i32 = arith.constant 0 : i32
    %c0_i32_0 = arith.constant 0 : i32
    %c0_i32_1 = arith.constant 0 : i32
    return %c0_i32, %c0_i32_0 : i32, i32
  }
  func.func @transform_6(%arg0: i32) -> (i32, i32) {
    %c0_i32 = arith.constant 0 : i32
    %c0_i32_0 = arith.constant 0 : i32
    %c0_i32_1 = arith.constant 0 : i32
    return %c0_i32, %c0_i32_0 : i32, i32
  }
  func.func @transform_7(%arg0: i32) -> (i32, i32) {
    %c0_i32 = arith.constant 0 : i32
    %c0_i32_0 = arith.constant 0 : i32
    %c0_i32_1 = arith.constant 0 : i32
    return %c0_i32, %c0_i32_0 : i32, i32
  }
  func.func @transform_8(%arg0: i32) -> (i32, i32) {
    %c0_i32 = arith.constant 0 : i32
    %c0_i32_0 = arith.constant 0 : i32
    %c0_i32_1 = arith.constant 0 : i32
    return %c0_i32, %c0_i32_0 : i32, i32
  }
  func.func @transform_9(%arg0: i32) -> (i32, i32) {
    %c0_i32 = arith.constant 0 : i32
    %c0_i32_0 = arith.constant 0 : i32
    %c0_i32_1 = arith.constant 0 : i32
    return %c0_i32, %c0_i32_0 : i32, i32
  }
  func.func @transform_10(%arg0: i32) -> (i32, i32) {
    %c0_i32 = arith.constant 0 : i32
    %c0_i32_0 = arith.constant 0 : i32
    %c0_i32_1 = arith.constant 0 : i32
    return %c0_i32, %c0_i32_0 : i32, i32
  }
  func.func @transform_11(%arg0: i32) -> (i32, i32) {
    %c0_i32 = arith.constant 0 : i32
    %c0_i32_0 = arith.constant 0 : i32
    %c0_i32_1 = arith.constant 0 : i32
    return %c0_i32, %c0_i32_0 : i32, i32
  }
  func.func @transform_12(%arg0: i32) -> (i32, i32) {
    %c0_i32 = arith.constant 0 : i32
    %c0_i32_0 = arith.constant 0 : i32
    %c0_i32_1 = arith.constant 0 : i32
    return %c0_i32, %c0_i32_0 : i32, i32
  }
  func.func @transform_13(%arg0: i32) -> (i32, i32) {
    %c0_i32 = arith.constant 0 : i32
    %c0_i32_0 = arith.constant 0 : i32
    return %arg0, %c0_i32 : i32, i32
  }
}

</mosaic_0001>

<llo_original>
// kernel: tpu_custom_call.1
$region0: #{tpu_custom_call.1}
  #allocation0 [shape = 'u32[]', space=smem, size = 0x4, offset = 0x4, fixed_abs, tag = 'smem constant byte address 0x4 - core index']
  #allocation1 [shape = 'u32[144,128]{1,0:T(1,128)}', space=vmem, size = 0x12000, scoped, tag = 'internal scratch']
  %s0 = inlined_call_operand.hbm [shape: f32[16,32], index: 0, kind: input, shape index: {}]
  %s1 = inlined_call_operand.hbm [shape: bf16[32,96], index: 1, kind: input, shape index: {}]
  %s2 = inlined_call_operand.vmem [shape: f32[1,96], index: 2, kind: input, shape index: {}]
  %s3 = inlined_call_operand.hbm [shape: bf16[32,32], index: 3, kind: input, shape index: {}]
  %s4 = inlined_call_operand.vmem [shape: f32[1,32], index: 4, kind: input, shape index: {}]
  %s5 = inlined_call_operand.hbm [shape: bf16[32,32], index: 5, kind: input, shape index: {}]
  %s6 = inlined_call_operand.vmem [shape: f32[1,32], index: 6, kind: input, shape index: {}]
  %s7 = inlined_call_operand.hbm [shape: bf16[32,32], index: 7, kind: input, shape index: {}]
  %s8 = inlined_call_operand.vmem [shape: f32[1,32], index: 8, kind: input, shape index: {}]
  %s9 = inlined_call_operand.vmem [shape: f32[1,32], index: 9, kind: input, shape index: {}]
  %s10 = inlined_call_operand.vmem [shape: f32[1,32], index: 10, kind: input, shape index: {}]
  %s11 = inlined_call_operand.vmem [shape: f32[1,32], index: 11, kind: input, shape index: {}]
  %s12 = inlined_call_operand.vmem [shape: f32[1,32], index: 12, kind: input, shape index: {}]
  %s13 = inlined_call_operand.hbm [shape: f32[16,32], index: 13, kind: output, shape index: {}]
  %s14 = sld [smem:[#allocation0]]
  $region82: #{tpu_custom_call.1} parent=0
    _
  %s16 = ssub.s32 1, %s14
  %s17 = scalar_select 0, %s16, %s14
  $region1: #{tpu_custom_call.1} parent=0
    #allocation2 [shape = 'u8[8192]{0}', space=vmem, size = 0x2000, scoped, tag = 'input window, operand 0, single buffered']
    #allocation3 [shape = 's32[1]{0}', space=sflag, size = 0x4, scoped, tag = 'scoped memory for tpu_custom_call.1']
    #allocation4 [shape = 's32[1]{0}', space=sflag, size = 0x4, scoped, tag = 'scoped memory for tpu_custom_call.1']
    #allocation5 [shape = 'u8[8192]{0}', space=vmem, size = 0x2000, scoped, tag = 'input window, operand 1, single buffered']
    #allocation6 [shape = 's32[1]{0}', space=sflag, size = 0x4, scoped, tag = 'scoped memory for tpu_custom_call.1']
    #allocation7 [shape = 'u8[8192]{0}', space=vmem, size = 0x2000, scoped, tag = 'input window, operand 3, single buffered']
    #allocation8 [shape = 'u8[8192]{0}', space=vmem, size = 0x2000, scoped, tag = 'input window, operand 5, single buffered']
    #allocation9 [shape = 's32[1]{0}', space=sflag, size = 0x4, scoped, tag = 'scoped memory for tpu_custom_call.1']
    #allocation10 [shape = 'u8[8192]{0}', space=vmem, size = 0x2000, scoped, tag = 'input window, operand 7, single buffered']
    #allocation11 [shape = 'u8[8192]{0}', space=vmem, size = 0x2000, scoped, tag = 'output window, operand 0, single buffered']
    %18 = vsyncpa [#allocation3], 0
    %19 = vsyncpa [#allocation6], 0
    %20 = vsyncpa [#allocation9], 0
    %21 = vsyncpa [#allocation4], 0
    // Predicated region
    $region2: #{tpu_custom_call.1} parent=1 // pred_check
      _
    $region3: #{tpu_custom_call.1} parent=1 // pred_check_branch
      %23 = sbr.rel (0) target = $region5
    $region4: #{tpu_custom_call.1} parent=1 // pred_region
      %s25 = ssub.s32 256, 256
      %26 = vsyncadd [#allocation3], %s25
      %s27 = sshll.u32 [#allocation2], 4
      %s28 = int_to_ptr.vmem [resolvable:$true] %s27
      %33 = dma.hbm_to_vmem [thread:$0]  %s0, 256, %s28, [#allocation3], 128, 128, 8
    $region5: #{tpu_custom_call.1} parent=1 // pred_fallthru
      _
    // Predicated region
    $region6: #{tpu_custom_call.1} parent=1 // pred_check
      _
    $region7: #{tpu_custom_call.1} parent=1 // pred_check_branch
      %35 = sbr.rel (0) target = $region9
    $region8: #{tpu_custom_call.1} parent=1 // pred_region
      %s37 = ssub.s32 256, 256
      %38 = vsyncadd [#allocation6], %s37
      %s39 = sshll.u32 [#allocation5], 4
      %s40 = int_to_ptr.vmem [resolvable:$true] %s39
      %45 = dma.hbm_to_vmem [thread:$0]  %s1, 256, %s40, [#allocation6], 64, 64, 4
    $region9: #{tpu_custom_call.1} parent=1 // pred_fallthru
      _
    // Predicated region
    $region10: #{tpu_custom_call.1} parent=1 // pred_check
      _
    $region11: #{tpu_custom_call.1} parent=1 // pred_check_branch
      %47 = sbr.rel (0) target = $region13
    $region12: #{tpu_custom_call.1} parent=1 // pred_region
      _
    $region13: #{tpu_custom_call.1} parent=1 // pred_fallthru
      _
    // Predicated region
    $region14: #{tpu_custom_call.1} parent=1 // pred_check
      _
    $region15: #{tpu_custom_call.1} parent=1 // pred_check_branch
      %49 = sbr.rel (0) target = $region17
    $region16: #{tpu_custom_call.1} parent=1 // pred_region
      %s51 = ssub.s32 256, 256
      %52 = vsyncadd [#allocation6], %s51
      %s53 = sshll.u32 [#allocation7], 4
      %s54 = int_to_ptr.vmem [resolvable:$true] %s53
      %59 = dma.hbm_to_vmem [thread:$0]  %s3, 256, %s54, [#allocation6], 64, 64, 4
    $region17: #{tpu_custom_call.1} parent=1 // pred_fallthru
      _
    // Predicated region
    $region18: #{tpu_custom_call.1} parent=1 // pred_check
      _
    $region19: #{tpu_custom_call.1} parent=1 // pred_check_branch
      %61 = sbr.rel (0) target = $region21
    $region20: #{tpu_custom_call.1} parent=1 // pred_region
      _
    $region21: #{tpu_custom_call.1} parent=1 // pred_fallthru
      _
    // Predicated region
    $region22: #{tpu_custom_call.1} parent=1 // pred_check
      _
    $region23: #{tpu_custom_call.1} parent=1 // pred_check_branch
      %63 = sbr.rel (0) target = $region25
    $region24: #{tpu_custom_call.1} parent=1 // pred_region
      %s65 = ssub.s32 256, 256
      %66 = vsyncadd [#allocation9], %s65
      %s67 = sshll.u32 [#allocation8], 4
      %s68 = int_to_ptr.vmem [resolvable:$true] %s67
      %73 = dma.hbm_to_vmem [thread:$0]  %s5, 256, %s68, [#allocation9], 64, 64, 4
    $region25: #{tpu_custom_call.1} parent=1 // pred_fallthru
      _
    // Predicated region
    $region26: #{tpu_custom_call.1} parent=1 // pred_check
      _
    $region27: #{tpu_custom_call.1} parent=1 // pred_check_branch
      %75 = sbr.rel (0) target = $region29
    $region28: #{tpu_custom_call.1} parent=1 // pred_region
      _
    $region29: #{tpu_custom_call.1} parent=1 // pred_fallthru
      _
    // Predicated region
    $region30: #{tpu_custom_call.1} parent=1 // pred_check
      _
    $region31: #{tpu_custom_call.1} parent=1 // pred_check_branch
      %77 = sbr.rel (0) target = $region33
    $region32: #{tpu_custom_call.1} parent=1 // pred_region
      %s79 = ssub.s32 256, 256
      %80 = vsyncadd [#allocation9], %s79
      %s81 = sshll.u32 [#allocation10], 4
      %s82 = int_to_ptr.vmem [resolvable:$true] %s81
      %87 = dma.hbm_to_vmem [thread:$0]  %s7, 256, %s82, [#allocation9], 64, 64, 4
    $region33: #{tpu_custom_call.1} parent=1 // pred_fallthru
      _
    // Predicated region
    $region34: #{tpu_custom_call.1} parent=1 // pred_check
      _
    $region35: #{tpu_custom_call.1} parent=1 // pred_check_branch
      %89 = sbr.rel (0) target = $region37
    $region36: #{tpu_custom_call.1} parent=1 // pred_region
      _
    $region37: #{tpu_custom_call.1} parent=1 // pred_fallthru
      _
    // Predicated region
    $region38: #{tpu_custom_call.1} parent=1 // pred_check
      _
    $region39: #{tpu_custom_call.1} parent=1 // pred_check_branch
      %91 = sbr.rel (0) target = $region41
    $region40: #{tpu_custom_call.1} parent=1 // pred_region
      _
    $region41: #{tpu_custom_call.1} parent=1 // pred_fallthru
      _
    // Predicated region
    $region42: #{tpu_custom_call.1} parent=1 // pred_check
      _
    $region43: #{tpu_custom_call.1} parent=1 // pred_check_branch
      %93 = sbr.rel (0) target = $region45
    $region44: #{tpu_custom_call.1} parent=1 // pred_region
      _
    $region45: #{tpu_custom_call.1} parent=1 // pred_fallthru
      _
    // Predicated region
    $region46: #{tpu_custom_call.1} parent=1 // pred_check
      _
    $region47: #{tpu_custom_call.1} parent=1 // pred_check_branch
      %95 = sbr.rel (0) target = $region49
    $region48: #{tpu_custom_call.1} parent=1 // pred_region
      _
    $region49: #{tpu_custom_call.1} parent=1 // pred_fallthru
      _
    // Predicated region
    $region50: #{tpu_custom_call.1} parent=1 // pred_check
      _
    $region51: #{tpu_custom_call.1} parent=1 // pred_check_branch
      %97 = sbr.rel (0) target = $region53
    $region52: #{tpu_custom_call.1} parent=1 // pred_region
      _
    $region53: #{tpu_custom_call.1} parent=1 // pred_fallthru
      _
    // Predicated region
    $region54: #{tpu_custom_call.1} parent=1 // pred_check
      _
    $region55: #{tpu_custom_call.1} parent=1 // pred_check_branch
      %99 = sbr.rel (0) target = $region57
    $region56: #{tpu_custom_call.1} parent=1 // pred_region
      %100 = dma.done [#allocation3], 256
    $region57: #{tpu_custom_call.1} parent=1 // pred_fallthru
      _
    // Predicated region
    $region58: #{tpu_custom_call.1} parent=1 // pred_check
      _
    $region59: #{tpu_custom_call.1} parent=1 // pred_check_branch
      %102 = sbr.rel (0) target = $region61
    $region60: #{tpu_custom_call.1} parent=1 // pred_region
      %103 = dma.done [#allocation6], 256
    $region61: #{tpu_custom_call.1} parent=1 // pred_fallthru
      _
    // Predicated region
    $region62: #{tpu_custom_call.1} parent=1 // pred_check
      _
    $region63: #{tpu_custom_call.1} parent=1 // pred_check_branch
      %105 = sbr.rel (0) target = $region65
    $region64: #{tpu_custom_call.1} parent=1 // pred_region
      %106 = dma.done [#allocation6], 256
    $region65: #{tpu_custom_call.1} parent=1 // pred_fallthru
      _
    // Predicated region
    $region66: #{tpu_custom_call.1} parent=1 // pred_check
      _
    $region67: #{tpu_custom_call.1} parent=1 // pred_check_branch
      %108 = sbr.rel (0) target = $region69
    $region68: #{tpu_custom_call.1} parent=1 // pred_region
      %109 = dma.done [#allocation9], 256
    $region69: #{tpu_custom_call.1} parent=1 // pred_fallthru
      _
    // Predicated region
    $region70: #{tpu_custom_call.1} parent=1 // pred_check
      _
    $region71: #{tpu_custom_call.1} parent=1 // pred_check_branch
      %111 = sbr.rel (0) target = $region73
    $region72: #{tpu_custom_call.1} parent=1 // pred_region
      %112 = dma.done [#allocation9], 256
    $region73: #{tpu_custom_call.1} parent=1 // pred_fallthru
      _
    %v114 = vld [vmem:[#allocation2] sm:$0xff]
    %v115 = vld [vmem:[#allocation2 + $0x8] sm:$0xff]
    %v116 = vpack.c.bf16 %v115, %v114
    %v117 = vld [vmem:[#allocation5] sm:$0xf]
    %v118 = vld [vmem:[#allocation5 + $0x4] sm:$0xf]
    %v119 = vld [vmem:[#allocation5 + $0x8] sm:$0xf]
    %v120 = vld [vmem:[#allocation5 + $0xc] sm:$0xf]
    %v121 = vld [vmem:[%s2] sm:$0x1]
    %v123 = vlaneseq
    %v124 = vshrl.u32 %v123, 7
    %v125 = vsub.s32 0, %v124
    %v126 = vrot.slane %v121, %v125
    %v132 = vunpack.c.l.b16 %v117
    %v133 = vunpack.c.l.b16 %v118
    %v134 = vunpack.c.l.b16 %v119
    %v135 = vunpack.c.l.b16 %v120
    %v136 = vpack.c.b16 %v133, %v132
    %v137 = vpack.c.b16 %v135, %v134
    %vm140 = vcmask 261120
    %v142 = vsel %vm140, %v116, 0
    %144 = vmatprep.subr.bf16.mxu0 0
    %145 = vmatpush1.bf16.msra.mxu0 0
    %146 = vmatprep.subr.bf16.mxu0 0
    %147 = vmatpush1.bf16.msra.mxu0 0
    %148 = vmatprep.subr.bf16.mxu0 0
    %149 = vmatpush1.bf16.msra.mxu0 0
    %150 = vmatprep.subr.bf16.mxu0 0
    %151 = vmatpush1.bf16.msra.mxu0 0
    %152 = vmatprep.subr.bf16.mxu0 0
    %153 = vmatpush1.bf16.msra.mxu0 0
    %154 = vmatprep.subr.bf16.mxu0 0
    %155 = vmatpush1.bf16.msra.mxu0 0
    %156 = vmatprep.subr.bf16.mxu0 0
    %157 = vmatpush1.bf16.msra.mxu0 %v137
    %158 = vmatprep.subr.bf16.mxu0 0
    %159 = vmatpush1.bf16.msra.mxu0 %v136
    %160 = vmatprep.subr.bf16.mxu0 0
    %161 = vmatpush2.bf16.msra.mxu0 0
    %162 = vmatprep.subr.bf16.mxu0 0
    %163 = vmatpush2.bf16.msra.mxu0 0
    %164 = vmatprep.subr.bf16.mxu0 0
    %165 = vmatpush2.bf16.msra.mxu0 0
    %166 = vmatprep.subr.bf16.mxu0 0
    %167 = vmatpush2.bf16.msra.mxu0 0
    %168 = vmatprep.subr.bf16.mxu0 0
    %169 = vmatpush2.bf16.msra.mxu0 0
    %170 = vmatprep.subr.bf16.mxu0 0
    %171 = vmatpush2.bf16.msra.mxu0 0
    %172 = vmatprep.subr.bf16.mxu0 0
    %173 = vmatpush2.bf16.msra.mxu0 0
    %174 = vmatprep.subr.bf16.mxu0 0
    %175 = vmatpush2.bf16.msra.mxu0 0
    %176 = vmatprep.mubr.bf16.mxu0 0
    %177 = vmatmul.mubr.bf16.gmra.mxu0 %v142
    %v178 = vpop.f32.mrf.mxu0
    %v179 = vadd.f32 %v126, %v178
    %v180 = vpop.f32.mrf.mxu0
    %v181 = vpop.f32.mrf.mxu0
    %v182 = vadd.f32 %v126, %v181
    %v183 = vpop.f32.mrf.mxu0
    %184 = vdwg.mxu0
    %187 = vrot.lane.b32.xlu0 %v179, 120
    %v188 = vpop.permute.xlu0 %187
    %189 = vrot.lane.b32.xlu0 %v182, 120
    %v190 = vpop.permute.xlu0 %189
    %193 = vrot.lane.b32.xlu0 %v179, 112
    %v194 = vpop.permute.xlu0 %193
    %195 = vrot.lane.b32.xlu0 %v182, 112
    %v196 = vpop.permute.xlu0 %195
    %199 = vrot.lane.b32.xlu0 %v179, 104
    %v200 = vpop.permute.xlu0 %199
    %201 = vrot.lane.b32.xlu0 %v182, 104
    %v202 = vpop.permute.xlu0 %201
    %205 = vrot.lane.b32.xlu0 %v179, 96
    %v206 = vpop.permute.xlu0 %205
    %207 = vrot.lane.b32.xlu0 %v182, 96
    %v208 = vpop.permute.xlu0 %207
    %211 = vrot.lane.b32.xlu0 %v179, 88
    %v212 = vpop.permute.xlu0 %211
    %213 = vrot.lane.b32.xlu0 %v182, 88
    %v214 = vpop.permute.xlu0 %213
    %217 = vrot.lane.b32.xlu0 %v179, 80
    %v218 = vpop.permute.xlu0 %217
    %219 = vrot.lane.b32.xlu0 %v182, 80
    %v220 = vpop.permute.xlu0 %219
    %223 = vrot.lane.b32.xlu0 %v179, 72
    %v224 = vpop.permute.xlu0 %223
    %225 = vrot.lane.b32.xlu0 %v182, 72
    %v226 = vpop.permute.xlu0 %225
    %229 = vrot.lane.b32.xlu0 %v179, 64
    %v230 = vpop.permute.xlu0 %229
    %231 = vrot.lane.b32.xlu0 %v182, 64
    %v232 = vpop.permute.xlu0 %231
    %235 = vrot.lane.b32.xlu0 %v179, 56
    %v236 = vpop.permute.xlu0 %235
    %237 = vrot.lane.b32.xlu0 %v182, 56
    %v238 = vpop.permute.xlu0 %237
    %241 = vrot.lane.b32.xlu0 %v179, 48
    %v242 = vpop.permute.xlu0 %241
    %243 = vrot.lane.b32.xlu0 %v182, 48
    %v244 = vpop.permute.xlu0 %243
    %247 = vrot.lane.b32.xlu0 %v179, 40
    %v248 = vpop.permute.xlu0 %247
    %249 = vrot.lane.b32.xlu0 %v182, 40
    %v250 = vpop.permute.xlu0 %249
    %v253 = vpack.c.bf16 %v179, %v179
    %v254 = vpack.c.bf16 %v182, %v182
    %v255 = vpack.c.bf16 %v188, %v188
    %v256 = vpack.c.bf16 %v190, %v190
    %v257 = vpack.c.bf16 %v194, %v194
    %v258 = vpack.c.bf16 %v196, %v196
    %v259 = vpack.c.bf16 %v200, %v200
    %v260 = vpack.c.bf16 %v202, %v202
    %v261 = vpack.c.bf16 %v206, %v206
    %v262 = vpack.c.bf16 %v208, %v208
    %v263 = vpack.c.bf16 %v212, %v212
    %v264 = vpack.c.bf16 %v214, %v214
    %v265 = vpack.c.bf16 %v218, %v218
    %v266 = vpack.c.bf16 %v220, %v220
    %v267 = vpack.c.bf16 %v224, %v224
    %v268 = vpack.c.bf16 %v226, %v226
    %v269 = vpack.c.bf16 %v230, %v230
    %v270 = vpack.c.bf16 %v232, %v232
    %v271 = vpack.c.bf16 %v236, %v236
    %v272 = vpack.c.bf16 %v238, %v238
    %v273 = vpack.c.bf16 %v242, %v242
    %v274 = vpack.c.bf16 %v244, %v244
    %v275 = vpack.c.bf16 %v248, %v248
    %v276 = vpack.c.bf16 %v250, %v250
    %vm277 = vcmask 64512
    %v279 = vsel %vm277, %v261, 0
    %v282 = vsel %vm277, %v253, 0
    %284 = vmatprep.subr.bf16.mxu0 0
    %285 = vmatpush1.bf16.xpose.msra.mxu0 0
    %286 = vmatprep.subr.bf16.mxu0 0
    %287 = vmatpush1.bf16.xpose.msra.mxu0 0
    %288 = vmatprep.subr.bf16.mxu0 0
    %289 = vmatpush1.bf16.xpose.msra.mxu0 0
    %290 = vmatprep.subr.bf16.mxu0 0
    %291 = vmatpush1.bf16.xpose.msra.mxu0 0
    %292 = vmatprep.subr.bf16.mxu0 0
    %293 = vmatpush1.bf16.xpose.msra.mxu0 0
    %294 = vmatprep.subr.bf16.mxu0 0
    %295 = vmatpush1.bf16.xpose.msra.mxu0 0
    %296 = vmatprep.subr.bf16.mxu0 0
    %297 = vmatpush1.bf16.xpose.msra.mxu0 0
    %298 = vmatprep.subr.bf16.mxu0 0
    %299 = vmatpush1.bf16.xpose.msra.mxu0 %v282
    %300 = vmatprep.subr.bf16.mxu0 0
    %301 = vmatpush2.bf16.xpose.msra.mxu0 0
    %302 = vmatprep.subr.bf16.mxu0 0
    %303 = vmatpush2.bf16.xpose.msra.mxu0 0
    %304 = vmatprep.subr.bf16.mxu0 0
    %305 = vmatpush2.bf16.xpose.msra.mxu0 0
    %306 = vmatprep.subr.bf16.mxu0 0
    %307 = vmatpush2.bf16.xpose.msra.mxu0 0
    %308 = vmatprep.subr.bf16.mxu0 0
    %309 = vmatpush2.bf16.xpose.msra.mxu0 0
    %310 = vmatprep.subr.bf16.mxu0 0
    %311 = vmatpush2.bf16.xpose.msra.mxu0 0
    %312 = vmatprep.subr.bf16.mxu0 0
    %313 = vmatpush2.bf16.xpose.msra.mxu0 0
    %314 = vmatprep.subr.bf16.mxu0 0
    %315 = vmatpush2.bf16.xpose.msra.mxu0 0
    %316 = vmatprep.mubr.bf16.mxu0 0
    %317 = vmatmul.mubr.bf16.gmra.mxu0 %v279
    %v318 = vpop.f32.mrf.mxu0
    %v319 = vadd.f32 0.0, %v318
    %v320 = vpop.f32.mrf.mxu0
    %v321 = vpop.f32.mrf.mxu0
    %v322 = vpop.f32.mrf.mxu0
    %323 = vdwg.mxu0
    %v325 = vsel %vm277, %v262, 0
    %v328 = vsel %vm277, %v254, 0
    %330 = vmatprep.subr.bf16.mxu0 0
    %331 = vmatpush1.bf16.xpose.msra.mxu0 0
    %332 = vmatprep.subr.bf16.mxu0 0
    %333 = vmatpush1.bf16.xpose.msra.mxu0 0
    %334 = vmatprep.subr.bf16.mxu0 0
    %335 = vmatpush1.bf16.xpose.msra.mxu0 0
    %336 = vmatprep.subr.bf16.mxu0 0
    %337 = vmatpush1.bf16.xpose.msra.mxu0 0
    %338 = vmatprep.subr.bf16.mxu0 0
    %339 = vmatpush1.bf16.xpose.msra.mxu0 0
    %340 = vmatprep.subr.bf16.mxu0 0
    %341 = vmatpush1.bf16.xpose.msra.mxu0 0
    %342 = vmatprep.subr.bf16.mxu0 0
    %343 = vmatpush1.bf16.xpose.msra.mxu0 0
    %344 = vmatprep.subr.bf16.mxu0 0
    %345 = vmatpush1.bf16.xpose.msra.mxu0 %v328
    %346 = vmatprep.subr.bf16.mxu0 0
    %347 = vmatpush2.bf16.xpose.msra.mxu0 0
    %348 = vmatprep.subr.bf16.mxu0 0
    %349 = vmatpush2.bf16.xpose.msra.mxu0 0
    %350 = vmatprep.subr.bf16.mxu0 0
    %351 = vmatpush2.bf16.xpose.msra.mxu0 0
    %352 = vmatprep.subr.bf16.mxu0 0
    %353 = vmatpush2.bf16.xpose.msra.mxu0 0
    %354 = vmatprep.subr.bf16.mxu0 0
    %355 = vmatpush2.bf16.xpose.msra.mxu0 0
    %356 = vmatprep.subr.bf16.mxu0 0
    %357 = vmatpush2.bf16.xpose.msra.mxu0 0
    %358 = vmatprep.subr.bf16.mxu0 0
    %359 = vmatpush2.bf16.xpose.msra.mxu0 0
    %360 = vmatprep.subr.bf16.mxu0 0
    %361 = vmatpush2.bf16.xpose.msra.mxu0 0
    %362 = vmatprep.mubr.bf16.mxu0 0
    %363 = vmatmul.mubr.bf16.gmra.mxu0 %v325
    %v364 = vpop.f32.mrf.mxu0
    %v365 = vadd.f32 0.0, %v364
    %v366 = vpop.f32.mrf.mxu0
    %v367 = vpop.f32.mrf.mxu0
    %v368 = vpop.f32.mrf.mxu0
    %369 = vdwg.mxu0
    %v371 = vsel %vm277, %v263, 0
    %v374 = vsel %vm277, %v255, 0
    %376 = vmatprep.subr.bf16.mxu0 0
    %377 = vmatpush1.bf16.xpose.msra.mxu0 0
    %378 = vmatprep.subr.bf16.mxu0 0
    %379 = vmatpush1.bf16.xpose.msra.mxu0 0
    %380 = vmatprep.subr.bf16.mxu0 0
    %381 = vmatpush1.bf16.xpose.msra.mxu0 0
    %382 = vmatprep.subr.bf16.mxu0 0
    %383 = vmatpush1.bf16.xpose.msra.mxu0 0
    %384 = vmatprep.subr.bf16.mxu0 0
    %385 = vmatpush1.bf16.xpose.msra.mxu0 0
    %386 = vmatprep.subr.bf16.mxu0 0
    %387 = vmatpush1.bf16.xpose.msra.mxu0 0
    %388 = vmatprep.subr.bf16.mxu0 0
    %389 = vmatpush1.bf16.xpose.msra.mxu0 0
    %390 = vmatprep.subr.bf16.mxu0 0
    %391 = vmatpush1.bf16.xpose.msra.mxu0 %v374
    %392 = vmatprep.subr.bf16.mxu0 0
    %393 = vmatpush2.bf16.xpose.msra.mxu0 0
    %394 = vmatprep.subr.bf16.mxu0 0
    %395 = vmatpush2.bf16.xpose.msra.mxu0 0
    %396 = vmatprep.subr.bf16.mxu0 0
    %397 = vmatpush2.bf16.xpose.msra.mxu0 0
    %398 = vmatprep.subr.bf16.mxu0 0
    %399 = vmatpush2.bf16.xpose.msra.mxu0 0
    %400 = vmatprep.subr.bf16.mxu0 0
    %401 = vmatpush2.bf16.xpose.msra.mxu0 0
    %402 = vmatprep.subr.bf16.mxu0 0
    %403 = vmatpush2.bf16.xpose.msra.mxu0 0
    %404 = vmatprep.subr.bf16.mxu0 0
    %405 = vmatpush2.bf16.xpose.msra.mxu0 0
    %406 = vmatprep.subr.bf16.mxu0 0
    %407 = vmatpush2.bf16.xpose.msra.mxu0 0
    %408 = vmatprep.mubr.bf16.mxu0 0
    %409 = vmatmul.mubr.bf16.gmra.mxu0 %v371
    %v410 = vpop.f32.mrf.mxu0
    %v411 = vadd.f32 0.0, %v410
    %v412 = vpop.f32.mrf.mxu0
    %v413 = vpop.f32.mrf.mxu0
    %v414 = vpop.f32.mrf.mxu0
    %415 = vdwg.mxu0
    %v417 = vsel %vm277, %v264, 0
    %v420 = vsel %vm277, %v256, 0
    %422 = vmatprep.subr.bf16.mxu0 0
    %423 = vmatpush1.bf16.xpose.msra.mxu0 0
    %424 = vmatprep.subr.bf16.mxu0 0
    %425 = vmatpush1.bf16.xpose.msra.mxu0 0
    %426 = vmatprep.subr.bf16.mxu0 0
    %427 = vmatpush1.bf16.xpose.msra.mxu0 0
    %428 = vmatprep.subr.bf16.mxu0 0
    %429 = vmatpush1.bf16.xpose.msra.mxu0 0
    %430 = vmatprep.subr.bf16.mxu0 0
    %431 = vmatpush1.bf16.xpose.msra.mxu0 0
    %432 = vmatprep.subr.bf16.mxu0 0
    %433 = vmatpush1.bf16.xpose.msra.mxu0 0
    %434 = vmatprep.subr.bf16.mxu0 0
    %435 = vmatpush1.bf16.xpose.msra.mxu0 0
    %436 = vmatprep.subr.bf16.mxu0 0
    %437 = vmatpush1.bf16.xpose.msra.mxu0 %v420
    %438 = vmatprep.subr.bf16.mxu0 0
    %439 = vmatpush2.bf16.xpose.msra.mxu0 0
    %440 = vmatprep.subr.bf16.mxu0 0
    %441 = vmatpush2.bf16.xpose.msra.mxu0 0
    %442 = vmatprep.subr.bf16.mxu0 0
    %443 = vmatpush2.bf16.xpose.msra.mxu0 0
    %444 = vmatprep.subr.bf16.mxu0 0
    %445 = vmatpush2.bf16.xpose.msra.mxu0 0
    %446 = vmatprep.subr.bf16.mxu0 0
    %447 = vmatpush2.bf16.xpose.msra.mxu0 0
    %448 = vmatprep.subr.bf16.mxu0 0
    %449 = vmatpush2.bf16.xpose.msra.mxu0 0
    %450 = vmatprep.subr.bf16.mxu0 0
    %451 = vmatpush2.bf16.xpose.msra.mxu0 0
    %452 = vmatprep.subr.bf16.mxu0 0
    %453 = vmatpush2.bf16.xpose.msra.mxu0 0
    %454 = vmatprep.mubr.bf16.mxu0 0
    %455 = vmatmul.mubr.bf16.gmra.mxu0 %v417
    %v456 = vpop.f32.mrf.mxu0
    %v457 = vadd.f32 0.0, %v456
    %v458 = vpop.f32.mrf.mxu0
    %v459 = vpop.f32.mrf.mxu0
    %v460 = vpop.f32.mrf.mxu0
    %461 = vdwg.mxu0
    %v463 = vsel %vm277, %v265, 0
    %v466 = vsel %vm277, %v257, 0
    %468 = vmatprep.subr.bf16.mxu0 0
    %469 = vmatpush1.bf16.xpose.msra.mxu0 0
    %470 = vmatprep.subr.bf16.mxu0 0
    %471 = vmatpush1.bf16.xpose.msra.mxu0 0
    %472 = vmatprep.subr.bf16.mxu0 0
    %473 = vmatpush1.bf16.xpose.msra.mxu0 0
    %474 = vmatprep.subr.bf16.mxu0 0
    %475 = vmatpush1.bf16.xpose.msra.mxu0 0
    %476 = vmatprep.subr.bf16.mxu0 0
    %477 = vmatpush1.bf16.xpose.msra.mxu0 0
    %478 = vmatprep.subr.bf16.mxu0 0
    %479 = vmatpush1.bf16.xpose.msra.mxu0 0
    %480 = vmatprep.subr.bf16.mxu0 0
    %481 = vmatpush1.bf16.xpose.msra.mxu0 0
    %482 = vmatprep.subr.bf16.mxu0 0
    %483 = vmatpush1.bf16.xpose.msra.mxu0 %v466
    %484 = vmatprep.subr.bf16.mxu0 0
    %485 = vmatpush2.bf16.xpose.msra.mxu0 0
    %486 = vmatprep.subr.bf16.mxu0 0
    %487 = vmatpush2.bf16.xpose.msra.mxu0 0
    %488 = vmatprep.subr.bf16.mxu0 0
    %489 = vmatpush2.bf16.xpose.msra.mxu0 0
    %490 = vmatprep.subr.bf16.mxu0 0
    %491 = vmatpush2.bf16.xpose.msra.mxu0 0
    %492 = vmatprep.subr.bf16.mxu0 0
    %493 = vmatpush2.bf16.xpose.msra.mxu0 0
    %494 = vmatprep.subr.bf16.mxu0 0
    %495 = vmatpush2.bf16.xpose.msra.mxu0 0
    %496 = vmatprep.subr.bf16.mxu0 0
    %497 = vmatpush2.bf16.xpose.msra.mxu0 0
    %498 = vmatprep.subr.bf16.mxu0 0
    %499 = vmatpush2.bf16.xpose.msra.mxu0 0
    %500 = vmatprep.mubr.bf16.mxu0 0
    %501 = vmatmul.mubr.bf16.gmra.mxu0 %v463
    %v502 = vpop.f32.mrf.mxu0
    %v503 = vadd.f32 0.0, %v502
    %v504 = vpop.f32.mrf.mxu0
    %v505 = vpop.f32.mrf.mxu0
    %v506 = vpop.f32.mrf.mxu0
    %507 = vdwg.mxu0
    %v509 = vsel %vm277, %v266, 0
    %v512 = vsel %vm277, %v258, 0
    %514 = vmatprep.subr.bf16.mxu0 0
    %515 = vmatpush1.bf16.xpose.msra.mxu0 0
    %516 = vmatprep.subr.bf16.mxu0 0
    %517 = vmatpush1.bf16.xpose.msra.mxu0 0
    %518 = vmatprep.subr.bf16.mxu0 0
    %519 = vmatpush1.bf16.xpose.msra.mxu0 0
    %520 = vmatprep.subr.bf16.mxu0 0
    %521 = vmatpush1.bf16.xpose.msra.mxu0 0
    %522 = vmatprep.subr.bf16.mxu0 0
    %523 = vmatpush1.bf16.xpose.msra.mxu0 0
    %524 = vmatprep.subr.bf16.mxu0 0
    %525 = vmatpush1.bf16.xpose.msra.mxu0 0
    %526 = vmatprep.subr.bf16.mxu0 0
    %527 = vmatpush1.bf16.xpose.msra.mxu0 0
    %528 = vmatprep.subr.bf16.mxu0 0
    %529 = vmatpush1.bf16.xpose.msra.mxu0 %v512
    %530 = vmatprep.subr.bf16.mxu0 0
    %531 = vmatpush2.bf16.xpose.msra.mxu0 0
    %532 = vmatprep.subr.bf16.mxu0 0
    %533 = vmatpush2.bf16.xpose.msra.mxu0 0
    %534 = vmatprep.subr.bf16.mxu0 0
    %535 = vmatpush2.bf16.xpose.msra.mxu0 0
    %536 = vmatprep.subr.bf16.mxu0 0
    %537 = vmatpush2.bf16.xpose.msra.mxu0 0
    %538 = vmatprep.subr.bf16.mxu0 0
    %539 = vmatpush2.bf16.xpose.msra.mxu0 0
    %540 = vmatprep.subr.bf16.mxu0 0
    %541 = vmatpush2.bf16.xpose.msra.mxu0 0
    %542 = vmatprep.subr.bf16.mxu0 0
    %543 = vmatpush2.bf16.xpose.msra.mxu0 0
    %544 = vmatprep.subr.bf16.mxu0 0
    %545 = vmatpush2.bf16.xpose.msra.mxu0 0
    %546 = vmatprep.mubr.bf16.mxu0 0
    %547 = vmatmul.mubr.bf16.gmra.mxu0 %v509
    %v548 = vpop.f32.mrf.mxu0
    %v549 = vadd.f32 0.0, %v548
    %v550 = vpop.f32.mrf.mxu0
    %v551 = vpop.f32.mrf.mxu0
    %v552 = vpop.f32.mrf.mxu0
    %553 = vdwg.mxu0
    %v555 = vsel %vm277, %v267, 0
    %v558 = vsel %vm277, %v259, 0
    %560 = vmatprep.subr.bf16.mxu0 0
    %561 = vmatpush1.bf16.xpose.msra.mxu0 0
    %562 = vmatprep.subr.bf16.mxu0 0
    %563 = vmatpush1.bf16.xpose.msra.mxu0 0
    %564 = vmatprep.subr.bf16.mxu0 0
    %565 = vmatpush1.bf16.xpose.msra.mxu0 0
    %566 = vmatprep.subr.bf16.mxu0 0
    %567 = vmatpush1.bf16.xpose.msra.mxu0 0
    %568 = vmatprep.subr.bf16.mxu0 0
    %569 = vmatpush1.bf16.xpose.msra.mxu0 0
    %570 = vmatprep.subr.bf16.mxu0 0
    %571 = vmatpush1.bf16.xpose.msra.mxu0 0
    %572 = vmatprep.subr.bf16.mxu0 0
    %573 = vmatpush1.bf16.xpose.msra.mxu0 0
    %574 = vmatprep.subr.bf16.mxu0 0
    %575 = vmatpush1.bf16.xpose.msra.mxu0 %v558
    %576 = vmatprep.subr.bf16.mxu0 0
    %577 = vmatpush2.bf16.xpose.msra.mxu0 0
    %578 = vmatprep.subr.bf16.mxu0 0
    %579 = vmatpush2.bf16.xpose.msra.mxu0 0
    %580 = vmatprep.subr.bf16.mxu0 0
    %581 = vmatpush2.bf16.xpose.msra.mxu0 0
    %582 = vmatprep.subr.bf16.mxu0 0
    %583 = vmatpush2.bf16.xpose.msra.mxu0 0
    %584 = vmatprep.subr.bf16.mxu0 0
    %585 = vmatpush2.bf16.xpose.msra.mxu0 0
    %586 = vmatprep.subr.bf16.mxu0 0
    %587 = vmatpush2.bf16.xpose.msra.mxu0 0
    %588 = vmatprep.subr.bf16.mxu0 0
    %589 = vmatpush2.bf16.xpose.msra.mxu0 0
    %590 = vmatprep.subr.bf16.mxu0 0
    %591 = vmatpush2.bf16.xpose.msra.mxu0 0
    %592 = vmatprep.mubr.bf16.mxu0 0
    %593 = vmatmul.mubr.bf16.gmra.mxu0 %v555
    %v594 = vpop.f32.mrf.mxu0
    %v595 = vadd.f32 0.0, %v594
    %v596 = vpop.f32.mrf.mxu0
    %v597 = vpop.f32.mrf.mxu0
    %v598 = vpop.f32.mrf.mxu0
    %599 = vdwg.mxu0
    %v601 = vsel %vm277, %v268, 0
    %v604 = vsel %vm277, %v260, 0
    %606 = vmatprep.subr.bf16.mxu0 0
    %607 = vmatpush1.bf16.xpose.msra.mxu0 0
    %608 = vmatprep.subr.bf16.mxu0 0
    %609 = vmatpush1.bf16.xpose.msra.mxu0 0
    %610 = vmatprep.subr.bf16.mxu0 0
    %611 = vmatpush1.bf16.xpose.msra.mxu0 0
    %612 = vmatprep.subr.bf16.mxu0 0
    %613 = vmatpush1.bf16.xpose.msra.mxu0 0
    %614 = vmatprep.subr.bf16.mxu0 0
    %615 = vmatpush1.bf16.xpose.msra.mxu0 0
    %616 = vmatprep.subr.bf16.mxu0 0
    %617 = vmatpush1.bf16.xpose.msra.mxu0 0
    %618 = vmatprep.subr.bf16.mxu0 0
    %619 = vmatpush1.bf16.xpose.msra.mxu0 0
    %620 = vmatprep.subr.bf16.mxu0 0
    %621 = vmatpush1.bf16.xpose.msra.mxu0 %v604
    %622 = vmatprep.subr.bf16.mxu0 0
    %623 = vmatpush2.bf16.xpose.msra.mxu0 0
    %624 = vmatprep.subr.bf16.mxu0 0
    %625 = vmatpush2.bf16.xpose.msra.mxu0 0
    %626 = vmatprep.subr.bf16.mxu0 0
    %627 = vmatpush2.bf16.xpose.msra.mxu0 0
    %628 = vmatprep.subr.bf16.mxu0 0
    %629 = vmatpush2.bf16.xpose.msra.mxu0 0
    %630 = vmatprep.subr.bf16.mxu0 0
    %631 = vmatpush2.bf16.xpose.msra.mxu0 0
    %632 = vmatprep.subr.bf16.mxu0 0
    %633 = vmatpush2.bf16.xpose.msra.mxu0 0
    %634 = vmatprep.subr.bf16.mxu0 0
    %635 = vmatpush2.bf16.xpose.msra.mxu0 0
    %636 = vmatprep.subr.bf16.mxu0 0
    %637 = vmatpush2.bf16.xpose.msra.mxu0 0
    %638 = vmatprep.mubr.bf16.mxu0 0
    %639 = vmatmul.mubr.bf16.gmra.mxu0 %v601
    %v640 = vpop.f32.mrf.mxu0
    %v641 = vadd.f32 0.0, %v640
    %v642 = vpop.f32.mrf.mxu0
    %v643 = vpop.f32.mrf.mxu0
    %v644 = vpop.f32.mrf.mxu0
    %645 = vdwg.mxu0
    %v646 = vmul.f32 %v319, 0.35355338
    %v647 = vmul.f32 %v365, 0.35355338
    %v648 = vmul.f32 %v411, 0.35355338
    %v649 = vmul.f32 %v457, 0.35355338
    %v650 = vmul.f32 %v503, 0.35355338
    %v651 = vmul.f32 %v549, 0.35355338
    %v652 = vmul.f32 %v595, 0.35355338
    %v653 = vmul.f32 %v641, 0.35355338
    %v654 = vsel %vm277, %v646, -inf
    %v655 = vrot.slane %v654, 4
    %v656 = vmax.f32 %v654, %v655
    %v657 = vrot.slane %v656, 2
    %v658 = vmax.f32 %v656, %v657
    %v659 = vrot.slane %v658, 1
    %v660 = vmax.f32 %v658, %v659
    %v661 = vsel %vm277, %v647, -inf
    %v662 = vrot.slane %v661, 4
    %v663 = vmax.f32 %v661, %v662
    %v664 = vrot.slane %v663, 2
    %v665 = vmax.f32 %v663, %v664
    %v666 = vrot.slane %v665, 1
    %v667 = vmax.f32 %v665, %v666
    %v668 = vsel %vm277, %v648, -inf
    %v669 = vrot.slane %v668, 4
    %v670 = vmax.f32 %v668, %v669
    %v671 = vrot.slane %v670, 2
    %v672 = vmax.f32 %v670, %v671
    %v673 = vrot.slane %v672, 1
    %v674 = vmax.f32 %v672, %v673
    %v675 = vsel %vm277, %v649, -inf
    %v676 = vrot.slane %v675, 4
    %v677 = vmax.f32 %v675, %v676
    %v678 = vrot.slane %v677, 2
    %v679 = vmax.f32 %v677, %v678
    %v680 = vrot.slane %v679, 1
    %v681 = vmax.f32 %v679, %v680
    %v682 = vsel %vm277, %v650, -inf
    %v683 = vrot.slane %v682, 4
    %v684 = vmax.f32 %v682, %v683
    %v685 = vrot.slane %v684, 2
    %v686 = vmax.f32 %v684, %v685
    %v687 = vrot.slane %v686, 1
    %v688 = vmax.f32 %v686, %v687
    %v689 = vsel %vm277, %v651, -inf
    %v690 = vrot.slane %v689, 4
    %v691 = vmax.f32 %v689, %v690
    %v692 = vrot.slane %v691, 2
    %v693 = vmax.f32 %v691, %v692
    %v694 = vrot.slane %v693, 1
    %v695 = vmax.f32 %v693, %v694
    %v696 = vsel %vm277, %v652, -inf
    %v697 = vrot.slane %v696, 4
    %v698 = vmax.f32 %v696, %v697
    %v699 = vrot.slane %v698, 2
    %v700 = vmax.f32 %v698, %v699
    %v701 = vrot.slane %v700, 1
    %v702 = vmax.f32 %v700, %v701
    %v703 = vsel %vm277, %v653, -inf
    %v704 = vrot.slane %v703, 4
    %v705 = vmax.f32 %v703, %v704
    %v706 = vrot.slane %v705, 2
    %v707 = vmax.f32 %v705, %v706
    %v708 = vrot.slane %v707, 1
    %v709 = vmax.f32 %v707, %v708
    %v710 = vsub.f32 %v646, %v660
    %v711 = vsub.f32 %v647, %v667
    %v712 = vsub.f32 %v648, %v674
    %v713 = vsub.f32 %v649, %v681
    %v714 = vsub.f32 %v650, %v688
    %v715 = vsub.f32 %v651, %v695
    %v716 = vsub.f32 %v652, %v702
    %v717 = vsub.f32 %v653, %v709
    %v718 = vmul.f32 %v710, 1.442695
    %v719 = vpow.pop %v718
    %v720 = vmul.f32 %v711, 1.442695
    %v721 = vpow.pop %v720
    %v722 = vmul.f32 %v712, 1.442695
    %v723 = vpow.pop %v722
    %v724 = vmul.f32 %v713, 1.442695
    %v725 = vpow.pop %v724
    %v726 = vmul.f32 %v714, 1.442695
    %v727 = vpow.pop %v726
    %v728 = vmul.f32 %v715, 1.442695
    %v729 = vpow.pop %v728
    %v730 = vmul.f32 %v716, 1.442695
    %v731 = vpow.pop %v730
    %v732 = vmul.f32 %v717, 1.442695
    %v733 = vpow.pop %v732
    %v734 = vsel %vm277, %v719, 0.0
    %v735 = vrot.slane %v734, 4
    %v736 = vadd.f32 %v734, %v735
    %v737 = vrot.slane %v736, 2
    %v738 = vadd.f32 %v736, %v737
    %v739 = vrot.slane %v738, 1
    %v740 = vadd.f32 %v738, %v739
    %v741 = vsel %vm277, %v721, 0.0
    %v742 = vrot.slane %v741, 4
    %v743 = vadd.f32 %v741, %v742
    %v744 = vrot.slane %v743, 2
    %v745 = vadd.f32 %v743, %v744
    %v746 = vrot.slane %v745, 1
    %v747 = vadd.f32 %v745, %v746
    %v748 = vsel %vm277, %v723, 0.0
    %v749 = vrot.slane %v748, 4
    %v750 = vadd.f32 %v748, %v749
    %v751 = vrot.slane %v750, 2
    %v752 = vadd.f32 %v750, %v751
    %v753 = vrot.slane %v752, 1
    %v754 = vadd.f32 %v752, %v753
    %v755 = vsel %vm277, %v725, 0.0
    %v756 = vrot.slane %v755, 4
    %v757 = vadd.f32 %v755, %v756
    %v758 = vrot.slane %v757, 2
    %v759 = vadd.f32 %v757, %v758
    %v760 = vrot.slane %v759, 1
    %v761 = vadd.f32 %v759, %v760
    %v762 = vsel %vm277, %v727, 0.0
    %v763 = vrot.slane %v762, 4
    %v764 = vadd.f32 %v762, %v763
    %v765 = vrot.slane %v764, 2
    %v766 = vadd.f32 %v764, %v765
    %v767 = vrot.slane %v766, 1
    %v768 = vadd.f32 %v766, %v767
    %v769 = vsel %vm277, %v729, 0.0
    %v770 = vrot.slane %v769, 4
    %v771 = vadd.f32 %v769, %v770
    %v772 = vrot.slane %v771, 2
    %v773 = vadd.f32 %v771, %v772
    %v774 = vrot.slane %v773, 1
    %v775 = vadd.f32 %v773, %v774
    %v776 = vsel %vm277, %v731, 0.0
    %v777 = vrot.slane %v776, 4
    %v778 = vadd.f32 %v776, %v777
    %v779 = vrot.slane %v778, 2
    %v780 = vadd.f32 %v778, %v779
    %v781 = vrot.slane %v780, 1
    %v782 = vadd.f32 %v780, %v781
    %v783 = vsel %vm277, %v733, 0.0
    %v784 = vrot.slane %v783, 4
    %v785 = vadd.f32 %v783, %v784
    %v786 = vrot.slane %v785, 2
    %v787 = vadd.f32 %v785, %v786
    %v788 = vrot.slane %v787, 1
    %v789 = vadd.f32 %v787, %v788
    %v790 = vrcp.pop %v740
    %v791 = vrcp.pop %v747
    %v792 = vrcp.pop %v754
    %v793 = vrcp.pop %v761
    %v794 = vrcp.pop %v768
    %v795 = vrcp.pop %v775
    %v796 = vrcp.pop %v782
    %v797 = vrcp.pop %v789
    %v798 = vmul.f32 %v719, %v790
    %v799 = vmul.f32 %v721, %v791
    %v800 = vmul.f32 %v723, %v792
    %v801 = vmul.f32 %v725, %v793
    %v802 = vmul.f32 %v727, %v794
    %v803 = vmul.f32 %v729, %v795
    %v804 = vmul.f32 %v731, %v796
    %v805 = vmul.f32 %v733, %v797
    %v806 = vpack.c.bf16 %v798, %v798
    %v807 = vpack.c.bf16 %v799, %v799
    %v808 = vpack.c.bf16 %v800, %v800
    %v809 = vpack.c.bf16 %v801, %v801
    %v810 = vpack.c.bf16 %v802, %v802
    %v811 = vpack.c.bf16 %v803, %v803
    %v812 = vpack.c.bf16 %v804, %v804
    %v813 = vpack.c.bf16 %v805, %v805
    %v815 = vsel %vm277, %v806, 0
    %vm817 = vcmask 1043456
    %v819 = vsel %vm817, %v269, 0
    %821 = vmatprep.subr.bf16.mxu0 0
    %822 = vmatpush1.bf16.msra.mxu0 0
    %823 = vmatprep.subr.bf16.mxu0 0
    %824 = vmatpush1.bf16.msra.mxu0 0
    %825 = vmatprep.subr.bf16.mxu0 0
    %826 = vmatpush1.bf16.msra.mxu0 0
    %827 = vmatprep.subr.bf16.mxu0 0
    %828 = vmatpush1.bf16.msra.mxu0 0
    %829 = vmatprep.subr.bf16.mxu0 0
    %830 = vmatpush1.bf16.msra.mxu0 0
    %831 = vmatprep.subr.bf16.mxu0 0
    %832 = vmatpush1.bf16.msra.mxu0 0
    %833 = vmatprep.subr.bf16.mxu0 0
    %834 = vmatpush1.bf16.msra.mxu0 0
    %835 = vmatprep.subr.bf16.mxu0 0
    %836 = vmatpush1.bf16.msra.mxu0 %v819
    %837 = vmatprep.subr.bf16.mxu0 0
    %838 = vmatpush2.bf16.msra.mxu0 0
    %839 = vmatprep.subr.bf16.mxu0 0
    %840 = vmatpush2.bf16.msra.mxu0 0
    %841 = vmatprep.subr.bf16.mxu0 0
    %842 = vmatpush2.bf16.msra.mxu0 0
    %843 = vmatprep.subr.bf16.mxu0 0
    %844 = vmatpush2.bf16.msra.mxu0 0
    %845 = vmatprep.subr.bf16.mxu0 0
    %846 = vmatpush2.bf16.msra.mxu0 0
    %847 = vmatprep.subr.bf16.mxu0 0
    %848 = vmatpush2.bf16.msra.mxu0 0
    %849 = vmatprep.subr.bf16.mxu0 0
    %850 = vmatpush2.bf16.msra.mxu0 0
    %851 = vmatprep.subr.bf16.mxu0 0
    %852 = vmatpush2.bf16.msra.mxu0 0
    %853 = vmatprep.mubr.bf16.mxu0 0
    %854 = vmatmul.mubr.bf16.gmra.mxu0 %v815
    %v855 = vpop.f32.mrf.mxu0
    %v856 = vadd.f32 0.0, %v855
    %v857 = vpop.f32.mrf.mxu0
    %v858 = vpop.f32.mrf.mxu0
    %v859 = vpop.f32.mrf.mxu0
    %860 = vdwg.mxu0
    %v862 = vsel %vm277, %v807, 0
    %v865 = vsel %vm817, %v270, 0
    %867 = vmatprep.subr.bf16.mxu0 0
    %868 = vmatpush1.bf16.msra.mxu0 0
    %869 = vmatprep.subr.bf16.mxu0 0
    %870 = vmatpush1.bf16.msra.mxu0 0
    %871 = vmatprep.subr.bf16.mxu0 0
    %872 = vmatpush1.bf16.msra.mxu0 0
    %873 = vmatprep.subr.bf16.mxu0 0
    %874 = vmatpush1.bf16.msra.mxu0 0
    %875 = vmatprep.subr.bf16.mxu0 0
    %876 = vmatpush1.bf16.msra.mxu0 0
    %877 = vmatprep.subr.bf16.mxu0 0
    %878 = vmatpush1.bf16.msra.mxu0 0
    %879 = vmatprep.subr.bf16.mxu0 0
    %880 = vmatpush1.bf16.msra.mxu0 0
    %881 = vmatprep.subr.bf16.mxu0 0
    %882 = vmatpush1.bf16.msra.mxu0 %v865
    %883 = vmatprep.subr.bf16.mxu0 0
    %884 = vmatpush2.bf16.msra.mxu0 0
    %885 = vmatprep.subr.bf16.mxu0 0
    %886 = vmatpush2.bf16.msra.mxu0 0
    %887 = vmatprep.subr.bf16.mxu0 0
    %888 = vmatpush2.bf16.msra.mxu0 0
    %889 = vmatprep.subr.bf16.mxu0 0
    %890 = vmatpush2.bf16.msra.mxu0 0
    %891 = vmatprep.subr.bf16.mxu0 0
    %892 = vmatpush2.bf16.msra.mxu0 0
    %893 = vmatprep.subr.bf16.mxu0 0
    %894 = vmatpush2.bf16.msra.mxu0 0
    %895 = vmatprep.subr.bf16.mxu0 0
    %896 = vmatpush2.bf16.msra.mxu0 0
    %897 = vmatprep.subr.bf16.mxu0 0
    %898 = vmatpush2.bf16.msra.mxu0 0
    %899 = vmatprep.mubr.bf16.mxu0 0
    %900 = vmatmul.mubr.bf16.gmra.mxu0 %v862
    %v901 = vpop.f32.mrf.mxu0
    %v902 = vadd.f32 0.0, %v901
    %v903 = vpop.f32.mrf.mxu0
    %v904 = vpop.f32.mrf.mxu0
    %v905 = vpop.f32.mrf.mxu0
    %906 = vdwg.mxu0
    %v908 = vsel %vm277, %v808, 0
    %v911 = vsel %vm817, %v271, 0
    %913 = vmatprep.subr.bf16.mxu0 0
    %914 = vmatpush1.bf16.msra.mxu0 0
    %915 = vmatprep.subr.bf16.mxu0 0
    %916 = vmatpush1.bf16.msra.mxu0 0
    %917 = vmatprep.subr.bf16.mxu0 0
    %918 = vmatpush1.bf16.msra.mxu0 0
    %919 = vmatprep.subr.bf16.mxu0 0
    %920 = vmatpush1.bf16.msra.mxu0 0
    %921 = vmatprep.subr.bf16.mxu0 0
    %922 = vmatpush1.bf16.msra.mxu0 0
    %923 = vmatprep.subr.bf16.mxu0 0
    %924 = vmatpush1.bf16.msra.mxu0 0
    %925 = vmatprep.subr.bf16.mxu0 0
    %926 = vmatpush1.bf16.msra.mxu0 0
    %927 = vmatprep.subr.bf16.mxu0 0
    %928 = vmatpush1.bf16.msra.mxu0 %v911
    %929 = vmatprep.subr.bf16.mxu0 0
    %930 = vmatpush2.bf16.msra.mxu0 0
    %931 = vmatprep.subr.bf16.mxu0 0
    %932 = vmatpush2.bf16.msra.mxu0 0
    %933 = vmatprep.subr.bf16.mxu0 0
    %934 = vmatpush2.bf16.msra.mxu0 0
    %935 = vmatprep.subr.bf16.mxu0 0
    %936 = vmatpush2.bf16.msra.mxu0 0
    %937 = vmatprep.subr.bf16.mxu0 0
    %938 = vmatpush2.bf16.msra.mxu0 0
    %939 = vmatprep.subr.bf16.mxu0 0
    %940 = vmatpush2.bf16.msra.mxu0 0
    %941 = vmatprep.subr.bf16.mxu0 0
    %942 = vmatpush2.bf16.msra.mxu0 0
    %943 = vmatprep.subr.bf16.mxu0 0
    %944 = vmatpush2.bf16.msra.mxu0 0
    %945 = vmatprep.mubr.bf16.mxu0 0
    %946 = vmatmul.mubr.bf16.gmra.mxu0 %v908
    %v947 = vpop.f32.mrf.mxu0
    %v948 = vadd.f32 0.0, %v947
    %v949 = vpop.f32.mrf.mxu0
    %v950 = vpop.f32.mrf.mxu0
    %v951 = vpop.f32.mrf.mxu0
    %952 = vdwg.mxu0
    %v954 = vsel %vm277, %v809, 0
    %v957 = vsel %vm817, %v272, 0
    %959 = vmatprep.subr.bf16.mxu0 0
    %960 = vmatpush1.bf16.msra.mxu0 0
    %961 = vmatprep.subr.bf16.mxu0 0
    %962 = vmatpush1.bf16.msra.mxu0 0
    %963 = vmatprep.subr.bf16.mxu0 0
    %964 = vmatpush1.bf16.msra.mxu0 0
    %965 = vmatprep.subr.bf16.mxu0 0
    %966 = vmatpush1.bf16.msra.mxu0 0
    %967 = vmatprep.subr.bf16.mxu0 0
    %968 = vmatpush1.bf16.msra.mxu0 0
    %969 = vmatprep.subr.bf16.mxu0 0
    %970 = vmatpush1.bf16.msra.mxu0 0
    %971 = vmatprep.subr.bf16.mxu0 0
    %972 = vmatpush1.bf16.msra.mxu0 0
    %973 = vmatprep.subr.bf16.mxu0 0
    %974 = vmatpush1.bf16.msra.mxu0 %v957
    %975 = vmatprep.subr.bf16.mxu0 0
    %976 = vmatpush2.bf16.msra.mxu0 0
    %977 = vmatprep.subr.bf16.mxu0 0
    %978 = vmatpush2.bf16.msra.mxu0 0
    %979 = vmatprep.subr.bf16.mxu0 0
    %980 = vmatpush2.bf16.msra.mxu0 0
    %981 = vmatprep.subr.bf16.mxu0 0
    %982 = vmatpush2.bf16.msra.mxu0 0
    %983 = vmatprep.subr.bf16.mxu0 0
    %984 = vmatpush2.bf16.msra.mxu0 0
    %985 = vmatprep.subr.bf16.mxu0 0
    %986 = vmatpush2.bf16.msra.mxu0 0
    %987 = vmatprep.subr.bf16.mxu0 0
    %988 = vmatpush2.bf16.msra.mxu0 0
    %989 = vmatprep.subr.bf16.mxu0 0
    %990 = vmatpush2.bf16.msra.mxu0 0
    %991 = vmatprep.mubr.bf16.mxu0 0
    %992 = vmatmul.mubr.bf16.gmra.mxu0 %v954
    %v993 = vpop.f32.mrf.mxu0
    %v994 = vadd.f32 0.0, %v993
    %v995 = vpop.f32.mrf.mxu0
    %v996 = vpop.f32.mrf.mxu0
    %v997 = vpop.f32.mrf.mxu0
    %998 = vdwg.mxu0
    %v1000 = vsel %vm277, %v810, 0
    %v1003 = vsel %vm817, %v273, 0
    %1005 = vmatprep.subr.bf16.mxu0 0
    %1006 = vmatpush1.bf16.msra.mxu0 0
    %1007 = vmatprep.subr.bf16.mxu0 0
    %1008 = vmatpush1.bf16.msra.mxu0 0
    %1009 = vmatprep.subr.bf16.mxu0 0
    %1010 = vmatpush1.bf16.msra.mxu0 0
    %1011 = vmatprep.subr.bf16.mxu0 0
    %1012 = vmatpush1.bf16.msra.mxu0 0
    %1013 = vmatprep.subr.bf16.mxu0 0
    %1014 = vmatpush1.bf16.msra.mxu0 0
    %1015 = vmatprep.subr.bf16.mxu0 0
    %1016 = vmatpush1.bf16.msra.mxu0 0
    %1017 = vmatprep.subr.bf16.mxu0 0
    %1018 = vmatpush1.bf16.msra.mxu0 0
    %1019 = vmatprep.subr.bf16.mxu0 0
    %1020 = vmatpush1.bf16.msra.mxu0 %v1003
    %1021 = vmatprep.subr.bf16.mxu0 0
    %1022 = vmatpush2.bf16.msra.mxu0 0
    %1023 = vmatprep.subr.bf16.mxu0 0
    %1024 = vmatpush2.bf16.msra.mxu0 0
    %1025 = vmatprep.subr.bf16.mxu0 0
    %1026 = vmatpush2.bf16.msra.mxu0 0
    %1027 = vmatprep.subr.bf16.mxu0 0
    %1028 = vmatpush2.bf16.msra.mxu0 0
    %1029 = vmatprep.subr.bf16.mxu0 0
    %1030 = vmatpush2.bf16.msra.mxu0 0
    %1031 = vmatprep.subr.bf16.mxu0 0
    %1032 = vmatpush2.bf16.msra.mxu0 0
    %1033 = vmatprep.subr.bf16.mxu0 0
    %1034 = vmatpush2.bf16.msra.mxu0 0
    %1035 = vmatprep.subr.bf16.mxu0 0
    %1036 = vmatpush2.bf16.msra.mxu0 0
    %1037 = vmatprep.mubr.bf16.mxu0 0
    %1038 = vmatmul.mubr.bf16.gmra.mxu0 %v1000
    %v1039 = vpop.f32.mrf.mxu0
    %v1040 = vadd.f32 0.0, %v1039
    %v1041 = vpop.f32.mrf.mxu0
    %v1042 = vpop.f32.mrf.mxu0
    %v1043 = vpop.f32.mrf.mxu0
    %1044 = vdwg.mxu0
    %v1046 = vsel %vm277, %v811, 0
    %v1049 = vsel %vm817, %v274, 0
    %1051 = vmatprep.subr.bf16.mxu0 0
    %1052 = vmatpush1.bf16.msra.mxu0 0
    %1053 = vmatprep.subr.bf16.mxu0 0
    %1054 = vmatpush1.bf16.msra.mxu0 0
    %1055 = vmatprep.subr.bf16.mxu0 0
    %1056 = vmatpush1.bf16.msra.mxu0 0
    %1057 = vmatprep.subr.bf16.mxu0 0
    %1058 = vmatpush1.bf16.msra.mxu0 0
    %1059 = vmatprep.subr.bf16.mxu0 0
    %1060 = vmatpush1.bf16.msra.mxu0 0
    %1061 = vmatprep.subr.bf16.mxu0 0
    %1062 = vmatpush1.bf16.msra.mxu0 0
    %1063 = vmatprep.subr.bf16.mxu0 0
    %1064 = vmatpush1.bf16.msra.mxu0 0
    %1065 = vmatprep.subr.bf16.mxu0 0
    %1066 = vmatpush1.bf16.msra.mxu0 %v1049
    %1067 = vmatprep.subr.bf16.mxu0 0
    %1068 = vmatpush2.bf16.msra.mxu0 0
    %1069 = vmatprep.subr.bf16.mxu0 0
    %1070 = vmatpush2.bf16.msra.mxu0 0
    %1071 = vmatprep.subr.bf16.mxu0 0
    %1072 = vmatpush2.bf16.msra.mxu0 0
    %1073 = vmatprep.subr.bf16.mxu0 0
    %1074 = vmatpush2.bf16.msra.mxu0 0
    %1075 = vmatprep.subr.bf16.mxu0 0
    %1076 = vmatpush2.bf16.msra.mxu0 0
    %1077 = vmatprep.subr.bf16.mxu0 0
    %1078 = vmatpush2.bf16.msra.mxu0 0
    %1079 = vmatprep.subr.bf16.mxu0 0
    %1080 = vmatpush2.bf16.msra.mxu0 0
    %1081 = vmatprep.subr.bf16.mxu0 0
    %1082 = vmatpush2.bf16.msra.mxu0 0
    %1083 = vmatprep.mubr.bf16.mxu0 0
    %1084 = vmatmul.mubr.bf16.gmra.mxu0 %v1046
    %v1085 = vpop.f32.mrf.mxu0
    %v1086 = vadd.f32 0.0, %v1085
    %v1087 = vpop.f32.mrf.mxu0
    %v1088 = vpop.f32.mrf.mxu0
    %v1089 = vpop.f32.mrf.mxu0
    %1090 = vdwg.mxu0
    %v1092 = vsel %vm277, %v812, 0
    %v1095 = vsel %vm817, %v275, 0
    %1097 = vmatprep.subr.bf16.mxu0 0
    %1098 = vmatpush1.bf16.msra.mxu0 0
    %1099 = vmatprep.subr.bf16.mxu0 0
    %1100 = vmatpush1.bf16.msra.mxu0 0
    %1101 = vmatprep.subr.bf16.mxu0 0
    %1102 = vmatpush1.bf16.msra.mxu0 0
    %1103 = vmatprep.subr.bf16.mxu0 0
    %1104 = vmatpush1.bf16.msra.mxu0 0
    %1105 = vmatprep.subr.bf16.mxu0 0
    %1106 = vmatpush1.bf16.msra.mxu0 0
    %1107 = vmatprep.subr.bf16.mxu0 0
    %1108 = vmatpush1.bf16.msra.mxu0 0
    %1109 = vmatprep.subr.bf16.mxu0 0
    %1110 = vmatpush1.bf16.msra.mxu0 0
    %1111 = vmatprep.subr.bf16.mxu0 0
    %1112 = vmatpush1.bf16.msra.mxu0 %v1095
    %1113 = vmatprep.subr.bf16.mxu0 0
    %1114 = vmatpush2.bf16.msra.mxu0 0
    %1115 = vmatprep.subr.bf16.mxu0 0
    %1116 = vmatpush2.bf16.msra.mxu0 0
    %1117 = vmatprep.subr.bf16.mxu0 0
    %1118 = vmatpush2.bf16.msra.mxu0 0
    %1119 = vmatprep.subr.bf16.mxu0 0
    %1120 = vmatpush2.bf16.msra.mxu0 0
    %1121 = vmatprep.subr.bf16.mxu0 0
    %1122 = vmatpush2.bf16.msra.mxu0 0
    %1123 = vmatprep.subr.bf16.mxu0 0
    %1124 = vmatpush2.bf16.msra.mxu0 0
    %1125 = vmatprep.subr.bf16.mxu0 0
    %1126 = vmatpush2.bf16.msra.mxu0 0
    %1127 = vmatprep.subr.bf16.mxu0 0
    %1128 = vmatpush2.bf16.msra.mxu0 0
    %1129 = vmatprep.mubr.bf16.mxu0 0
    %1130 = vmatmul.mubr.bf16.gmra.mxu0 %v1092
    %v1131 = vpop.f32.mrf.mxu0
    %v1132 = vadd.f32 0.0, %v1131
    %v1133 = vpop.f32.mrf.mxu0
    %v1134 = vpop.f32.mrf.mxu0
    %v1135 = vpop.f32.mrf.mxu0
    %1136 = vdwg.mxu0
    %v1138 = vsel %vm277, %v813, 0
    %v1141 = vsel %vm817, %v276, 0
    %1143 = vmatprep.subr.bf16.mxu0 0
    %1144 = vmatpush1.bf16.msra.mxu0 0
    %1145 = vmatprep.subr.bf16.mxu0 0
    %1146 = vmatpush1.bf16.msra.mxu0 0
    %1147 = vmatprep.subr.bf16.mxu0 0
    %1148 = vmatpush1.bf16.msra.mxu0 0
    %1149 = vmatprep.subr.bf16.mxu0 0
    %1150 = vmatpush1.bf16.msra.mxu0 0
    %1151 = vmatprep.subr.bf16.mxu0 0
    %1152 = vmatpush1.bf16.msra.mxu0 0
    %1153 = vmatprep.subr.bf16.mxu0 0
    %1154 = vmatpush1.bf16.msra.mxu0 0
    %1155 = vmatprep.subr.bf16.mxu0 0
    %1156 = vmatpush1.bf16.msra.mxu0 0
    %1157 = vmatprep.subr.bf16.mxu0 0
    %1158 = vmatpush1.bf16.msra.mxu0 %v1141
    %1159 = vmatprep.subr.bf16.mxu0 0
    %1160 = vmatpush2.bf16.msra.mxu0 0
    %1161 = vmatprep.subr.bf16.mxu0 0
    %1162 = vmatpush2.bf16.msra.mxu0 0
    %1163 = vmatprep.subr.bf16.mxu0 0
    %1164 = vmatpush2.bf16.msra.mxu0 0
    %1165 = vmatprep.subr.bf16.mxu0 0
    %1166 = vmatpush2.bf16.msra.mxu0 0
    %1167 = vmatprep.subr.bf16.mxu0 0
    %1168 = vmatpush2.bf16.msra.mxu0 0
    %1169 = vmatprep.subr.bf16.mxu0 0
    %1170 = vmatpush2.bf16.msra.mxu0 0
    %1171 = vmatprep.subr.bf16.mxu0 0
    %1172 = vmatpush2.bf16.msra.mxu0 0
    %1173 = vmatprep.subr.bf16.mxu0 0
    %1174 = vmatpush2.bf16.msra.mxu0 0
    %1175 = vmatprep.mubr.bf16.mxu0 0
    %1176 = vmatmul.mubr.bf16.gmra.mxu0 %v1138
    %v1177 = vpop.f32.mrf.mxu0
    %v1178 = vadd.f32 0.0, %v1177
    %v1179 = vpop.f32.mrf.mxu0
    %v1180 = vpop.f32.mrf.mxu0
    %v1181 = vpop.f32.mrf.mxu0
    %1182 = vdwg.mxu0
    %1185 = vrot.lane.b32.xlu0 %v948, 8
    %v1186 = vpop.permute.xlu0 %1185
    %1187 = vrot.lane.b32.xlu0 %v994, 8
    %v1188 = vpop.permute.xlu0 %1187
    %1193 = vrot.lane.b32.xlu0 %v1040, 16
    %v1194 = vpop.permute.xlu0 %1193
    %1195 = vrot.lane.b32.xlu0 %v1086, 16
    %v1196 = vpop.permute.xlu0 %1195
    %1201 = vrot.lane.b32.xlu0 %v1132, 24
    %v1202 = vpop.permute.xlu0 %1201
    %1203 = vrot.lane.b32.xlu0 %v1178, 24
    %v1204 = vpop.permute.xlu0 %1203
    %v1207 = vsel %vm277, %v856, %v1186
    %v1208 = vsel %vm277, %v902, %v1188
    %vm1209 = vcmask 130048
    %v1210 = vsel %vm1209, %v1207, %v1194
    %v1211 = vsel %vm1209, %v1208, %v1196
    %vm1212 = vcmask 195584
    %v1213 = vsel %vm1212, %v1210, %v1202
    %v1214 = vsel %vm1212, %v1211, %v1204
    %v1215 = vpack.c.bf16 %v1214, %v1213
    %v1216 = vld [vmem:[#allocation7] sm:$0xf]
    %v1217 = vld [vmem:[#allocation7 + $0x4] sm:$0xf]
    %v1218 = vld [vmem:[#allocation7 + $0x8] sm:$0xf]
    %v1219 = vld [vmem:[#allocation7 + $0xc] sm:$0xf]
    %v1220 = vld [vmem:[%s4] sm:$0x1]
    %v1222 = vlaneseq
    %v1223 = vshrl.u32 %v1222, 7
    %v1224 = vsub.s32 0, %v1223
    %v1225 = vrot.slane %v1220, %v1224
    %v1231 = vunpack.c.l.b16 %v1216
    %v1232 = vunpack.c.l.b16 %v1217
    %v1233 = vunpack.c.l.b16 %v1218
    %v1234 = vunpack.c.l.b16 %v1219
    %v1235 = vpack.c.b16 %v1232, %v1231
    %v1236 = vpack.c.b16 %v1234, %v1233
    %v1240 = vsel %vm140, %v1215, 0
    %1242 = vmatprep.subr.bf16.mxu0 0
    %1243 = vmatpush1.bf16.msra.mxu0 0
    %1244 = vmatprep.subr.bf16.mxu0 0
    %1245 = vmatpush1.bf16.msra.mxu0 0
    %1246 = vmatprep.subr.bf16.mxu0 0
    %1247 = vmatpush1.bf16.msra.mxu0 0
    %1248 = vmatprep.subr.bf16.mxu0 0
    %1249 = vmatpush1.bf16.msra.mxu0 0
    %1250 = vmatprep.subr.bf16.mxu0 0
    %1251 = vmatpush1.bf16.msra.mxu0 0
    %1252 = vmatprep.subr.bf16.mxu0 0
    %1253 = vmatpush1.bf16.msra.mxu0 0
    %1254 = vmatprep.subr.bf16.mxu0 0
    %1255 = vmatpush1.bf16.msra.mxu0 %v1236
    %1256 = vmatprep.subr.bf16.mxu0 0
    %1257 = vmatpush1.bf16.msra.mxu0 %v1235
    %1258 = vmatprep.subr.bf16.mxu0 0
    %1259 = vmatpush2.bf16.msra.mxu0 0
    %1260 = vmatprep.subr.bf16.mxu0 0
    %1261 = vmatpush2.bf16.msra.mxu0 0
    %1262 = vmatprep.subr.bf16.mxu0 0
    %1263 = vmatpush2.bf16.msra.mxu0 0
    %1264 = vmatprep.subr.bf16.mxu0 0
    %1265 = vmatpush2.bf16.msra.mxu0 0
    %1266 = vmatprep.subr.bf16.mxu0 0
    %1267 = vmatpush2.bf16.msra.mxu0 0
    %1268 = vmatprep.subr.bf16.mxu0 0
    %1269 = vmatpush2.bf16.msra.mxu0 0
    %1270 = vmatprep.subr.bf16.mxu0 0
    %1271 = vmatpush2.bf16.msra.mxu0 0
    %1272 = vmatprep.subr.bf16.mxu0 0
    %1273 = vmatpush2.bf16.msra.mxu0 0
    %1274 = vmatprep.mubr.bf16.mxu0 0
    %1275 = vmatmul.mubr.bf16.gmra.mxu0 %v1240
    %v1276 = vpop.f32.mrf.mxu0
    %v1277 = vadd.f32 %v1225, %v1276
    %v1278 = vpop.f32.mrf.mxu0
    %v1279 = vpop.f32.mrf.mxu0
    %v1280 = vadd.f32 %v1225, %v1279
    %v1281 = vpop.f32.mrf.mxu0
    %1282 = vdwg.mxu0
    %v1283 = vadd.f32 %v114, %v1277
    %v1284 = vadd.f32 %v115, %v1280
    %v1285 = vld [vmem:[%s9] sm:$0x1]
    %v1286 = vld [vmem:[%s10] sm:$0x1]
    %v1287 = vsel %vm140, %v1283, 0.0
    %1288 = vadd.xlane.f32.xlu0 %v1287
    %v1289 = vpop.xlane.xlu0 %1288
    %v1290 = vsel %vm140, %v1284, 0.0
    %1291 = vadd.xlane.f32.xlu0 %v1290
    %v1292 = vpop.xlane.xlu0 %1291
    %v1293 = vrcp.pop 32.0
    %v1294 = vmul.f32 %v1289, %v1293
    %v1295 = vmul.f32 %v1292, %v1293
    %v1296 = vsub.f32 %v1283, %v1294
    %v1297 = vsub.f32 %v1284, %v1295
    %v1298 = vmul.f32 %v1296, %v1296
    %v1299 = vmul.f32 %v1297, %v1297
    %v1300 = vsel %vm140, %v1298, 0.0
    %1301 = vadd.xlane.f32.xlu0 %v1300
    %v1302 = vpop.xlane.xlu0 %1301
    %v1303 = vsel %vm140, %v1299, 0.0
    %1304 = vadd.xlane.f32.xlu0 %v1303
    %v1305 = vpop.xlane.xlu0 %1304
    %v1306 = vmul.f32 %v1302, %v1293
    %v1307 = vmul.f32 %v1305, %v1293
    %v1308 = vadd.f32 %v1306, 1e-05
    %v1309 = vadd.f32 %v1307, 1e-05
    %v1310 = vrsqrt.pop %v1308
    %v1311 = vrsqrt.pop %v1309
    %v1312 = vmul.f32 %v1296, %v1310
    %v1313 = vmul.f32 %v1297, %v1311
    %v1315 = vlaneseq
    %v1316 = vshrl.u32 %v1315, 7
    %v1317 = vsub.s32 0, %v1316
    %v1318 = vrot.slane %v1285, %v1317
    %v1320 = vmul.f32 %v1312, %v1318
    %v1321 = vmul.f32 %v1313, %v1318
    %v1323 = vlaneseq
    %v1324 = vshrl.u32 %v1323, 7
    %v1325 = vsub.s32 0, %v1324
    %v1326 = vrot.slane %v1286, %v1325
    %v1328 = vadd.f32 %v1320, %v1326
    %v1329 = vadd.f32 %v1321, %v1326
    %v1330 = vpack.c.bf16 %v1329, %v1328
    %v1331 = vld [vmem:[#allocation8] sm:$0xf]
    %v1332 = vld [vmem:[#allocation8 + $0x4] sm:$0xf]
    %v1333 = vld [vmem:[#allocation8 + $0x8] sm:$0xf]
    %v1334 = vld [vmem:[#allocation8 + $0xc] sm:$0xf]
    %v1335 = vld [vmem:[%s6] sm:$0x1]
    %v1337 = vlaneseq
    %v1338 = vshrl.u32 %v1337, 7
    %v1339 = vsub.s32 0, %v1338
    %v1340 = vrot.slane %v1335, %v1339
    %v1346 = vunpack.c.l.b16 %v1331
    %v1347 = vunpack.c.l.b16 %v1332
    %v1348 = vunpack.c.l.b16 %v1333
    %v1349 = vunpack.c.l.b16 %v1334
    %v1350 = vpack.c.b16 %v1347, %v1346
    %v1351 = vpack.c.b16 %v1349, %v1348
    %v1355 = vsel %vm140, %v1330, 0
    %1357 = vmatprep.subr.bf16.mxu0 0
    %1358 = vmatpush1.bf16.msra.mxu0 0
    %1359 = vmatprep.subr.bf16.mxu0 0
    %1360 = vmatpush1.bf16.msra.mxu0 0
    %1361 = vmatprep.subr.bf16.mxu0 0
    %1362 = vmatpush1.bf16.msra.mxu0 0
    %1363 = vmatprep.subr.bf16.mxu0 0
    %1364 = vmatpush1.bf16.msra.mxu0 0
    %1365 = vmatprep.subr.bf16.mxu0 0
    %1366 = vmatpush1.bf16.msra.mxu0 0
    %1367 = vmatprep.subr.bf16.mxu0 0
    %1368 = vmatpush1.bf16.msra.mxu0 0
    %1369 = vmatprep.subr.bf16.mxu0 0
    %1370 = vmatpush1.bf16.msra.mxu0 %v1351
    %1371 = vmatprep.subr.bf16.mxu0 0
    %1372 = vmatpush1.bf16.msra.mxu0 %v1350
    %1373 = vmatprep.subr.bf16.mxu0 0
    %1374 = vmatpush2.bf16.msra.mxu0 0
    %1375 = vmatprep.subr.bf16.mxu0 0
    %1376 = vmatpush2.bf16.msra.mxu0 0
    %1377 = vmatprep.subr.bf16.mxu0 0
    %1378 = vmatpush2.bf16.msra.mxu0 0
    %1379 = vmatprep.subr.bf16.mxu0 0
    %1380 = vmatpush2.bf16.msra.mxu0 0
    %1381 = vmatprep.subr.bf16.mxu0 0
    %1382 = vmatpush2.bf16.msra.mxu0 0
    %1383 = vmatprep.subr.bf16.mxu0 0
    %1384 = vmatpush2.bf16.msra.mxu0 0
    %1385 = vmatprep.subr.bf16.mxu0 0
    %1386 = vmatpush2.bf16.msra.mxu0 0
    %1387 = vmatprep.subr.bf16.mxu0 0
    %1388 = vmatpush2.bf16.msra.mxu0 0
    %1389 = vmatprep.mubr.bf16.mxu0 0
    %1390 = vmatmul.mubr.bf16.gmra.mxu0 %v1355
    %v1391 = vpop.f32.mrf.mxu0
    %v1392 = vadd.f32 %v1340, %v1391
    %v1393 = vpop.f32.mrf.mxu0
    %v1394 = vpop.f32.mrf.mxu0
    %v1395 = vadd.f32 %v1340, %v1394
    %v1396 = vpop.f32.mrf.mxu0
    %1397 = vdwg.mxu0
    %v1398 = vmul.f32 %v1392, 0.5
    %v1399 = vmul.f32 %v1395, 0.5
    %v1400 = vmul.f32 %v1392, 0.70710677
    %v1401 = vmul.f32 %v1395, 0.70710677
    %v1402 = vand.u32 2147483647, %v1400
    %v1403 = vand.u32 2147483647, %v1401
    %v1404 = vmul.f32 %v1402, 0.3275911
    %v1405 = vmul.f32 %v1403, 0.3275911
    %v1406 = vadd.f32 %v1404, 1.0
    %v1407 = vadd.f32 %v1405, 1.0
    %v1408 = vrcp.pop %v1406
    %v1409 = vmul.f32 1.0, %v1408
    %v1410 = vrcp.pop %v1407
    %v1411 = vmul.f32 1.0, %v1410
    %v1412 = vmul.f32 %v1409, 1.0614054
    %v1413 = vmul.f32 %v1411, 1.0614054
    %v1414 = vadd.f32 %v1412, -1.4531521
    %v1415 = vadd.f32 %v1413, -1.4531521
    %v1416 = vmul.f32 %v1414, %v1409
    %v1417 = vmul.f32 %v1415, %v1411
    %v1418 = vadd.f32 %v1416, 1.4214138
    %v1419 = vadd.f32 %v1417, 1.4214138
    %v1420 = vmul.f32 %v1418, %v1409
    %v1421 = vmul.f32 %v1419, %v1411
    %v1422 = vadd.f32 %v1420, -0.28449672
    %v1423 = vadd.f32 %v1421, -0.28449672
    %v1424 = vmul.f32 %v1422, %v1409
    %v1425 = vmul.f32 %v1423, %v1411
    %v1426 = vadd.f32 %v1424, 0.2548296
    %v1427 = vadd.f32 %v1425, 0.2548296
    %v1428 = vmul.f32 %v1426, %v1409
    %v1429 = vmul.f32 %v1427, %v1411
    %v1430 = vsub.f32 0.0, %v1402
    %v1431 = vsub.f32 0.0, %v1403
    %v1432 = vmul.f32 %v1430, %v1402
    %v1433 = vmul.f32 %v1431, %v1403
    %v1434 = vmul.f32 %v1432, 1.442695
    %v1435 = vpow.pop %v1434
    %v1436 = vmul.f32 %v1433, 1.442695
    %v1437 = vpow.pop %v1436
    %v1438 = vmul.f32 %v1428, %v1435
    %v1439 = vmul.f32 %v1429, %v1437
    %v1440 = vsub.f32 1.0, %v1438
    %v1441 = vsub.f32 1.0, %v1439
    %vm1442 = vcmp.ge.f32.partialorder %v1400, 0.0
    %vm1443 = vcmp.ge.f32.partialorder %v1401, 0.0
    %v1444 = vsub.f32 0.0, %v1440
    %v1445 = vsub.f32 0.0, %v1441
    %v1446 = vsel %vm1442, %v1440, %v1444
    %v1447 = vsel %vm1443, %v1441, %v1445
    %v1448 = vadd.f32 %v1446, 1.0
    %v1449 = vadd.f32 %v1447, 1.0
    %v1450 = vmul.f32 %v1398, %v1448
    %v1451 = vmul.f32 %v1399, %v1449
    %v1452 = vpack.c.bf16 %v1451, %v1450
    %v1453 = vld [vmem:[#allocation10] sm:$0xf]
    %v1454 = vld [vmem:[#allocation10 + $0x4] sm:$0xf]
    %v1455 = vld [vmem:[#allocation10 + $0x8] sm:$0xf]
    %v1456 = vld [vmem:[#allocation10 + $0xc] sm:$0xf]
    %v1457 = vld [vmem:[%s8] sm:$0x1]
    %v1459 = vlaneseq
    %v1460 = vshrl.u32 %v1459, 7
    %v1461 = vsub.s32 0, %v1460
    %v1462 = vrot.slane %v1457, %v1461
    %v1468 = vunpack.c.l.b16 %v1453
    %v1469 = vunpack.c.l.b16 %v1454
    %v1470 = vunpack.c.l.b16 %v1455
    %v1471 = vunpack.c.l.b16 %v1456
    %v1472 = vpack.c.b16 %v1469, %v1468
    %v1473 = vpack.c.b16 %v1471, %v1470
    %v1477 = vsel %vm140, %v1452, 0
    %1479 = vmatprep.subr.bf16.mxu0 0
    %1480 = vmatpush1.bf16.msra.mxu0 0
    %1481 = vmatprep.subr.bf16.mxu0 0
    %1482 = vmatpush1.bf16.msra.mxu0 0
    %1483 = vmatprep.subr.bf16.mxu0 0
    %1484 = vmatpush1.bf16.msra.mxu0 0
    %1485 = vmatprep.subr.bf16.mxu0 0
    %1486 = vmatpush1.bf16.msra.mxu0 0
    %1487 = vmatprep.subr.bf16.mxu0 0
    %1488 = vmatpush1.bf16.msra.mxu0 0
    %1489 = vmatprep.subr.bf16.mxu0 0
    %1490 = vmatpush1.bf16.msra.mxu0 0
    %1491 = vmatprep.subr.bf16.mxu0 0
    %1492 = vmatpush1.bf16.msra.mxu0 %v1473
    %1493 = vmatprep.subr.bf16.mxu0 0
    %1494 = vmatpush1.bf16.msra.mxu0 %v1472
    %1495 = vmatprep.subr.bf16.mxu0 0
    %1496 = vmatpush2.bf16.msra.mxu0 0
    %1497 = vmatprep.subr.bf16.mxu0 0
    %1498 = vmatpush2.bf16.msra.mxu0 0
    %1499 = vmatprep.subr.bf16.mxu0 0
    %1500 = vmatpush2.bf16.msra.mxu0 0
    %1501 = vmatprep.subr.bf16.mxu0 0
    %1502 = vmatpush2.bf16.msra.mxu0 0
    %1503 = vmatprep.subr.bf16.mxu0 0
    %1504 = vmatpush2.bf16.msra.mxu0 0
    %1505 = vmatprep.subr.bf16.mxu0 0
    %1506 = vmatpush2.bf16.msra.mxu0 0
    %1507 = vmatprep.subr.bf16.mxu0 0
    %1508 = vmatpush2.bf16.msra.mxu0 0
    %1509 = vmatprep.subr.bf16.mxu0 0
    %1510 = vmatpush2.bf16.msra.mxu0 0
    %1511 = vmatprep.mubr.bf16.mxu0 0
    %1512 = vmatmul.mubr.bf16.gmra.mxu0 %v1477
    %v1513 = vpop.f32.mrf.mxu0
    %v1514 = vadd.f32 %v1462, %v1513
    %v1515 = vpop.f32.mrf.mxu0
    %v1516 = vpop.f32.mrf.mxu0
    %v1517 = vadd.f32 %v1462, %v1516
    %v1518 = vpop.f32.mrf.mxu0
    %1519 = vdwg.mxu0
    %v1520 = vadd.f32 %v1328, %v1514
    %v1521 = vadd.f32 %v1329, %v1517
    %v1522 = vld [vmem:[%s11] sm:$0x1]
    %v1523 = vld [vmem:[%s12] sm:$0x1]
    %v1524 = vsel %vm140, %v1520, 0.0
    %1525 = vadd.xlane.f32.xlu0 %v1524
    %v1526 = vpop.xlane.xlu0 %1525
    %v1527 = vsel %vm140, %v1521, 0.0
    %1528 = vadd.xlane.f32.xlu0 %v1527
    %v1529 = vpop.xlane.xlu0 %1528
    %v1530 = vmul.f32 %v1526, %v1293
    %v1531 = vmul.f32 %v1529, %v1293
    %v1532 = vsub.f32 %v1520, %v1530
    %v1533 = vsub.f32 %v1521, %v1531
    %v1534 = vmul.f32 %v1532, %v1532
    %v1535 = vmul.f32 %v1533, %v1533
    %v1536 = vsel %vm140, %v1534, 0.0
    %1537 = vadd.xlane.f32.xlu0 %v1536
    %v1538 = vpop.xlane.xlu0 %1537
    %v1539 = vsel %vm140, %v1535, 0.0
    %1540 = vadd.xlane.f32.xlu0 %v1539
    %v1541 = vpop.xlane.xlu0 %1540
    %v1542 = vmul.f32 %v1538, %v1293
    %v1543 = vmul.f32 %v1541, %v1293
    %v1544 = vadd.f32 %v1542, 1e-05
    %v1545 = vadd.f32 %v1543, 1e-05
    %v1546 = vrsqrt.pop %v1544
    %v1547 = vrsqrt.pop %v1545
    %v1548 = vmul.f32 %v1532, %v1546
    %v1549 = vmul.f32 %v1533, %v1547
    %v1551 = vlaneseq
    %v1552 = vshrl.u32 %v1551, 7
    %v1553 = vsub.s32 0, %v1552
    %v1554 = vrot.slane %v1522, %v1553
    %v1556 = vmul.f32 %v1548, %v1554
    %v1557 = vmul.f32 %v1549, %v1554
    %v1559 = vlaneseq
    %v1560 = vshrl.u32 %v1559, 7
    %v1561 = vsub.s32 0, %v1560
    %v1562 = vrot.slane %v1523, %v1561
    %v1564 = vadd.f32 %v1556, %v1562
    %v1565 = vadd.f32 %v1557, %v1562
    %1566 = vst.msk [vmem:[#allocation11] sm:$0xff] %vm140, %v1564
    %1567 = vst.msk [vmem:[#allocation11 + $0x8] sm:$0xff] %vm140, %v1565
    // Predicated region
    $region74: #{tpu_custom_call.1} parent=1 // pred_check
      _
    $region75: #{tpu_custom_call.1} parent=1 // pred_check_branch
      %1569 = sbr.rel (0) target = $region77
    $region76: #{tpu_custom_call.1} parent=1 // pred_region
      %s1571 = ssub.s32 256, 256
      %1572 = vsyncadd [#allocation4], %s1571
      %s1573 = sshll.u32 [#allocation11], 4
      %s1574 = int_to_ptr.vmem [resolvable:$true] %s1573
      %1579 = dma.vmem_to_hbm [thread:$0]  %s1574, 256, %s13, [#allocation4], 128, 128, 8
    $region77: #{tpu_custom_call.1} parent=1 // pred_fallthru
      _
    // Predicated region
    $region78: #{tpu_custom_call.1} parent=1 // pred_check
      _
    $region79: #{tpu_custom_call.1} parent=1 // pred_check_branch
      %1581 = sbr.rel (0) target = $region81
    $region80: #{tpu_custom_call.1} parent=1 // pred_region
      %1582 = dma.done [#allocation4], 256
    $region81: #{tpu_custom_call.1} parent=1 // pred_fallthru
      _
    %1583 = vsyncpa [#allocation3], 1
    %1584 = vsyncpa [#allocation6], 1
    %1585 = vsyncpa [#allocation9], 1
    %1586 = vsyncpa [#allocation4], 1

</llo_original>
